<compile_context>
chip_gen: v7x
topology: tpu7x:2x2x1
jax: 0.10.0
libtpu: 0.0.40
codegen_flags: <defaults>
</compile_context>

<pallas_src>
import jax
import jax.numpy as jnp
from jax import lax
from jax.experimental import pallas as pl
from jax.experimental.pallas import tpu as pltpu

EPS = 1e-12  # guards zero embedding rows / zero g (torch would NaN)


# ----------------------------------------------------------------------------
# Fused forward kernel (one batch element per grid step)
# ----------------------------------------------------------------------------
def _make_fused_kernel(S):
    def kernel(*refs):
        # ---- unpack refs (S is static) ------------------------------------
        ec_ref = refs[0]                        # (1, N, Ec)
        es_refs = refs[1:1 + S]                 # each (1, N, Es)
        wc_ref = refs[1 + S]                    # (Ec, Hd)
        ws_refs = refs[2 + S:2 + 2 * S]         # each (Es, Hd)
        bh_ref = refs[2 + 2 * S]                # (1, Hd)
        wzh_ref = refs[3 + 2 * S]               # (Hd, T)
        wzs_refs = refs[4 + 2 * S:4 + 3 * S]    # each (Hd, T)
        bz_ref = refs[4 + 3 * S]                # (1, T)
        z_ref = refs[5 + 3 * S]                 # out (1, S+1, N, T)
        ss_ref = refs[6 + 3 * S]                # out (1, 1, S)

        f32 = jnp.float32

        # ---- h = x2h(concat(embeds))  (weights split by rows -> no concat) -
        x_c = ec_ref[0]                         # (N, Ec)
        h = jnp.dot(x_c, wc_ref[...], preferred_element_type=f32)
        xs = []
        for s in range(S):
            x_s = es_refs[s][0]                 # (N, Es)
            xs.append(x_s)
            h = h + jnp.dot(x_s, ws_refs[s][...], preferred_element_type=f32)
        h = h + bh_ref[...]                     # (N, Hd)

        # ---- hg2z contribution of h (bias applied once here) ---------------
        z_ref[0, 0] = (jnp.dot(h, wzh_ref[...], preferred_element_type=f32)
                       + bz_ref[...]).astype(z_ref.dtype)

        # ---- per-subword cosine attention ----------------------------------
        ss_parts = []
        for s in range(S):
            x_s = xs[s]
            # cosine-similarity scores (rsqrt -> EUP slot; EPS guards 0-rows)
            inv_n = lax.rsqrt(jnp.sum(x_s * x_s, axis=1, keepdims=True) + EPS)
            xn = x_s * inv_n
            sc = lax.dot_general(xn, xn, (((1,), (1,)), ((), ())),
                                 preferred_element_type=f32)        # (N, N)
            # cosine scores are in [-1, 1] -> skip the softmax max-shift
            e = jnp.exp(sc)
            p = e * pl.reciprocal(jnp.sum(e, axis=1, keepdims=True),
                                  approx=True)
            # torch builds H identical score rows and sums them (H * p @ h);
            # the H factor cancels against the global-norm division -> drop.
            g = jnp.dot(p, h, preferred_element_type=f32)           # (N, Hd)
            ss_parts.append(jnp.sum(g * g, keepdims=True))          # (1, 1)
            z_ref[0, 1 + s] = jnp.dot(g, wzs_refs[s][...],
                                      preferred_element_type=f32
                                      ).astype(z_ref.dtype)
        ss_ref[0] = jnp.concatenate(ss_parts, axis=1)               # (1, S)

    return kernel


def _fused_forward(embed_char, embed_subs, wc, ws_list, bh, wzh, wzs_list, bz):
    """embed_char: (B,N,Ec), embed_subs: list of (B,N,Es)  (batch-first)."""
    B, N, Ec = embed_char.shape
    S = len(embed_subs)
    Hd = wc.shape[1]
    T = wzh.shape[1]

    in_specs = (
        [pl.BlockSpec((1, N, Ec), lambda b: (b, 0, 0))]
        + [pl.BlockSpec((1, N, e.shape[2]), lambda b: (b, 0, 0))
           for e in embed_subs]
        + [pl.BlockSpec(wc.shape, lambda b: (0, 0))]
        + [pl.BlockSpec(w.shape, lambda b: (0, 0)) for w in ws_list]
        + [pl.BlockSpec((1, Hd), lambda b: (0, 0))]
        + [pl.BlockSpec((Hd, T), lambda b: (0, 0))]
        + [pl.BlockSpec((Hd, T), lambda b: (0, 0)) for _ in wzs_list]
        + [pl.BlockSpec((1, T), lambda b: (0, 0))]
    )
    out_shape = (
        jax.ShapeDtypeStruct((B, S + 1, N, T), jnp.float32),   # zh + y_s
        jax.ShapeDtypeStruct((B, 1, S), jnp.float32),          # per-batch ||g_s||^2
    )
    out_specs = (
        pl.BlockSpec((1, S + 1, N, T), lambda b: (b, 0, 0, 0)),
        pl.BlockSpec((1, 1, S), lambda b: (b, 0, 0)),
    )

    y, ss = pl.pallas_call(
        _make_fused_kernel(S),
        out_shape=out_shape,
        grid=(B,),
        in_specs=in_specs,
        out_specs=out_specs,
        compiler_params=pltpu.CompilerParams(
            dimension_semantics=("parallel",),      # batch -> both TCs
            vmem_limit_bytes=32 * 1024 * 1024,
        ),
    )(embed_char, *embed_subs, wc, *ws_list,
      bh.reshape(1, Hd), wzh, *wzs_list, bz.reshape(1, T))
    return y, ss


# ----------------------------------------------------------------------------
# Module wrapper (parameter init + glue)
# ----------------------------------------------------------------------------
def init_params(key, char_vocab_dim, sub_vocab_dims, tag_dim,
                char_embed_dim, sub_embed_dims, hidden_dim):
    n_sub = len(sub_vocab_dims)
    keys = jax.random.split(key, 4 + n_sub)
    params = {}
    params["embed_char"] = jax.random.normal(
        keys[0], (char_vocab_dim, char_embed_dim), jnp.float32)
    params["embed_subs"] = [
        jax.random.normal(keys[1 + i], (v, e), jnp.float32)
        for i, (v, e) in enumerate(zip(sub_vocab_dims, sub_embed_dims))
    ]
    in_dim = char_embed_dim + sum(sub_embed_dims)
    params["x2h_w"] = 0.1 * jax.random.normal(
        keys[1 + n_sub], (in_dim, hidden_dim), jnp.float32)
    params["x2h_b"] = jnp.zeros((hidden_dim,), jnp.float32)
    hg_dim = hidden_dim * (1 + n_sub)
    params["hg2z_w"] = 0.1 * jax.random.normal(
        keys[2 + n_sub], (hg_dim, tag_dim), jnp.float32)
    params["hg2z_b"] = jnp.zeros((tag_dim,), jnp.float32)
    return params


@jax.jit
def tagger_forward(params, x_char, x_subs):
    """Equivalent of MultiSubwordAttentionTagger._forward.

    x_char: (N, B) int32, x_subs: tuple of (N, B) int32.
    Returns emission scores z: (N, B, tag_dim).
    """
    # Transpose only the tiny int index arrays so the gathers produce
    # batch-first embeddings directly (no HBM transpose of float tensors).
    xc_bt = x_char.T                              # (B, N)
    xs_bt = [xi.T for xi in x_subs]
    embed_char = jnp.take(params["embed_char"], xc_bt, axis=0)   # (B,N,Ec)
    embed_subs = [jnp.take(tbl, idx, axis=0)
                  for tbl, idx in zip(params["embed_subs"], xs_bt)]

    Ec = embed_char.shape[2]
    sub_dims = [e.shape[2] for e in embed_subs]
    Hd = params["x2h_w"].shape[1]
    S = len(embed_subs)

    # Split the concat-linear weights; avoids any embedding / hg concat.
    wx = params["x2h_w"]
    wc = wx[:Ec]
    ws_list, off = [], Ec
    for d in sub_dims:
        ws_list.append(wx[off:off + d])
        off += d
    wz = params["hg2z_w"]
    wzh = wz[:Hd]
    wzs_list = [wz[Hd * (1 + s):Hd * (2 + s)] for s in range(S)]

    y, ss = _fused_forward(embed_char, embed_subs, wc, ws_list,
                           params["x2h_b"], wzh, wzs_list,
                           params["hg2z_b"])

    # Global Frobenius norm of each g_s from the per-batch sums of squares.
    total_ss = jnp.sum(ss, axis=(0, 1))           # (S,)
    inv_norm = lax.rsqrt(total_ss + EPS)          # (S,)
    weights = jnp.concatenate(
        [jnp.ones((1,), jnp.float32), inv_norm])  # (S+1,)

    # z = zh + sum_s inv_norm[s] * y_s    (hg2z is linear -> exact)
    z_bt = jnp.einsum("bsnt,s->bnt", y, weights)  # (B, N, T)
    # Back to the module's sequence-first layout; z is the smallest tensor
    # in the graph so this transpose is negligible.
    return jnp.transpose(z_bt, (1, 0, 2))         # (N, B, T)


# ----------------------------------------------------------------------------
# Pure-JAX reference (same math, exact softmax) for a numeric sanity check
# ----------------------------------------------------------------------------
def reference_forward(params, x_char, x_subs):
    embed_char = jnp.take(params["embed_char"], x_char, axis=0)      # (N,B,Ec)
    embed_subs = [jnp.take(t, i, axis=0)
                  for t, i in zip(params["embed_subs"], x_subs)]
    embed = jnp.concatenate([embed_char] + embed_subs, axis=2)
    h = jnp.einsum("nbe,eh->nbh", embed, params["x2h_w"]) + params["x2h_b"]
    g_subs = []
    hb = jnp.transpose(h, (1, 0, 2))
    for x in embed_subs:
        xb = jnp.transpose(x, (1, 0, 2))
        nrm = jnp.sqrt(jnp.sum(xb * xb, axis=2, keepdims=True) + EPS)
        xn = xb / nrm
        sc = jnp.einsum("bne,bme->bnm", xn, xn)
        p = jax.nn.softmax(sc, axis=2)
        g = jnp.einsum("bnm,bmh->bnh", p, hb)        # H factor cancels w/ norm
        g = jnp.transpose(g, (1, 0, 2))
        g_subs.append(g * lax.rsqrt(jnp.sum(g * g) + EPS))
    hg = jnp.concatenate([h] + g_subs, axis=2)
    return jnp.einsum("nbk,kt->nbt", hg, params["hg2z_w"]) + params["hg2z_b"]


# ----------------------------------------------------------------------------
# Main
# ----------------------------------------------------------------------------
if __name__ == "__main__":
    N, B = 8, 2                       # sequence length, batch size
    char_vocab_dim, char_embed_dim = 16, 8
    sub_vocab_dims, sub_embed_dims = [12, 10], [8, 8]
    hidden_dim, tag_dim = 16, 5

    key = jax.random.PRNGKey(0)
    k_par, k_c, k_s0, k_s1 = jax.random.split(key, 4)

    params = init_params(k_par, char_vocab_dim, sub_vocab_dims, tag_dim,
                         char_embed_dim, sub_embed_dims, hidden_dim)

    x_char = jax.random.randint(k_c, (N, B), 0, char_vocab_dim, jnp.int32)
    x_subs = (
        jax.random.randint(k_s0, (N, B), 0, sub_vocab_dims[0], jnp.int32),
        jax.random.randint(k_s1, (N, B), 0, sub_vocab_dims[1], jnp.int32),
    )

    z = tagger_forward(params, x_char, x_subs)
    jax.block_until_ready(z)
    assert z.shape == (N, B, tag_dim)

    z_ref = reference_forward(params, x_char, x_subs)
    assert bool(jnp.allclose(z, z_ref, rtol=2e-2, atol=2e-2)), \
        "Pallas output does not match JAX reference"

    print("KERNEL_OK")
</pallas_src>

<mosaic_0001>
module attributes {stable_mosaic.version = 11 : i64} {
  func.func @kernel(%arg0: i32, %arg1: memref<1x8x8xf32, #tpu.memory_space<vmem>>, %arg2: memref<1x8x8xf32, #tpu.memory_space<vmem>>, %arg3: memref<1x8x8xf32, #tpu.memory_space<vmem>>, %arg4: memref<8x16xf32, #tpu.memory_space<vmem>>, %arg5: memref<8x16xf32, #tpu.memory_space<vmem>>, %arg6: memref<8x16xf32, #tpu.memory_space<vmem>>, %arg7: memref<1x16xf32, #tpu.memory_space<vmem>>, %arg8: memref<16x5xf32, #tpu.memory_space<vmem>>, %arg9: memref<16x5xf32, #tpu.memory_space<vmem>>, %arg10: memref<16x5xf32, #tpu.memory_space<vmem>>, %arg11: memref<1x5xf32, #tpu.memory_space<vmem>>, %arg12: memref<1x3x8x5xf32, #tpu.memory_space<vmem>>, %arg13: memref<1x1x2xf32, #tpu.memory_space<vmem>>) attributes {dimension_semantics = [#tpu.dimension_semantics<parallel>], iteration_bounds = array<i64: 2>, scalar_prefetch = 0 : i64, scratch_operands = 0 : i64, tpu.core_type = #tpu.core_type<tc>, window_params = [{transform_indices = @transform_0, window_bounds = array<i64: 1, 8, 8>}, {transform_indices = @transform_1, window_bounds = array<i64: 1, 8, 8>}, {transform_indices = @transform_2, window_bounds = array<i64: 1, 8, 8>}, {pipeline_mode = #tpu.pipeline_mode<synchronous>, transform_indices = @transform_3, window_bounds = array<i64: 8, 16>}, {pipeline_mode = #tpu.pipeline_mode<synchronous>, transform_indices = @transform_4, window_bounds = array<i64: 8, 16>}, {pipeline_mode = #tpu.pipeline_mode<synchronous>, transform_indices = @transform_5, window_bounds = array<i64: 8, 16>}, {pipeline_mode = #tpu.pipeline_mode<synchronous>, transform_indices = @transform_6, window_bounds = array<i64: 1, 16>}, {pipeline_mode = #tpu.pipeline_mode<synchronous>, transform_indices = @transform_7, window_bounds = array<i64: 16, 5>}, {pipeline_mode = #tpu.pipeline_mode<synchronous>, transform_indices = @transform_8, window_bounds = array<i64: 16, 5>}, {pipeline_mode = #tpu.pipeline_mode<synchronous>, transform_indices = @transform_9, window_bounds = array<i64: 16, 5>}, {pipeline_mode = #tpu.pipeline_mode<synchronous>, transform_indices = @transform_10, window_bounds = array<i64: 1, 5>}, {transform_indices = @transform_11, window_bounds = array<i64: 1, 3, 8, 5>}, {transform_indices = @transform_12, window_bounds = array<i64: 1, 1, 2>}]} {
    %c0 = arith.constant 0 : index
    %c0_0 = arith.constant 0 : index
    %c0_1 = arith.constant 0 : index
    %0 = vector.load %arg1[%c0, %c0_0, %c0_1] : memref<1x8x8xf32, #tpu.memory_space<vmem>>, vector<1x8x8xf32>
    %1 = vector.shape_cast %0 : vector<1x8x8xf32> to vector<8x8xf32>
    %c0_2 = arith.constant 0 : index
    %c0_3 = arith.constant 0 : index
    %2 = vector.load %arg4[%c0_2, %c0_3] : memref<8x16xf32, #tpu.memory_space<vmem>>, vector<8x16xf32>
    %cst = arith.constant dense<0.000000e+00> : vector<8x16xf32>
    %3 = tpu.matmul %1, %2, %cst {dimension_numbers = #tpu.dot_dimension_numbers<[1], [0], [0], [1], [0, 0, 1, 1], [], []>} : vector<8x8xf32>, vector<8x16xf32>, vector<8x16xf32> -> vector<8x16xf32>
    %c0_4 = arith.constant 0 : index
    %c0_5 = arith.constant 0 : index
    %c0_6 = arith.constant 0 : index
    %4 = vector.load %arg2[%c0_4, %c0_5, %c0_6] : memref<1x8x8xf32, #tpu.memory_space<vmem>>, vector<1x8x8xf32>
    %5 = vector.shape_cast %4 : vector<1x8x8xf32> to vector<8x8xf32>
    %c0_7 = arith.constant 0 : index
    %c0_8 = arith.constant 0 : index
    %6 = vector.load %arg5[%c0_7, %c0_8] : memref<8x16xf32, #tpu.memory_space<vmem>>, vector<8x16xf32>
    %cst_9 = arith.constant dense<0.000000e+00> : vector<8x16xf32>
    %7 = tpu.matmul %5, %6, %cst_9 {dimension_numbers = #tpu.dot_dimension_numbers<[1], [0], [0], [1], [0, 0, 1, 1], [], []>} : vector<8x8xf32>, vector<8x16xf32>, vector<8x16xf32> -> vector<8x16xf32>
    %8 = arith.addf %3, %7 : vector<8x16xf32>
    %c0_10 = arith.constant 0 : index
    %c0_11 = arith.constant 0 : index
    %c0_12 = arith.constant 0 : index
    %9 = vector.load %arg3[%c0_10, %c0_11, %c0_12] : memref<1x8x8xf32, #tpu.memory_space<vmem>>, vector<1x8x8xf32>
    %10 = vector.shape_cast %9 : vector<1x8x8xf32> to vector<8x8xf32>
    %c0_13 = arith.constant 0 : index
    %c0_14 = arith.constant 0 : index
    %11 = vector.load %arg6[%c0_13, %c0_14] : memref<8x16xf32, #tpu.memory_space<vmem>>, vector<8x16xf32>
    %cst_15 = arith.constant dense<0.000000e+00> : vector<8x16xf32>
    %12 = tpu.matmul %10, %11, %cst_15 {dimension_numbers = #tpu.dot_dimension_numbers<[1], [0], [0], [1], [0, 0, 1, 1], [], []>} : vector<8x8xf32>, vector<8x16xf32>, vector<8x16xf32> -> vector<8x16xf32>
    %13 = arith.addf %8, %12 : vector<8x16xf32>
    %c0_16 = arith.constant 0 : index
    %c0_17 = arith.constant 0 : index
    %14 = vector.load %arg7[%c0_16, %c0_17] : memref<1x16xf32, #tpu.memory_space<vmem>>, vector<1x16xf32>
    %15 = vector.broadcast %14 : vector<1x16xf32> to vector<8x16xf32>
    %16 = arith.addf %13, %15 : vector<8x16xf32>
    %c0_18 = arith.constant 0 : index
    %c0_19 = arith.constant 0 : index
    %17 = vector.load %arg8[%c0_18, %c0_19] : memref<16x5xf32, #tpu.memory_space<vmem>>, vector<16x5xf32>
    %cst_20 = arith.constant dense<0.000000e+00> : vector<8x5xf32>
    %18 = tpu.matmul %16, %17, %cst_20 {dimension_numbers = #tpu.dot_dimension_numbers<[1], [0], [0], [1], [0, 0, 1, 1], [], []>} : vector<8x16xf32>, vector<16x5xf32>, vector<8x5xf32> -> vector<8x5xf32>
    %c0_21 = arith.constant 0 : index
    %c0_22 = arith.constant 0 : index
    %19 = vector.load %arg11[%c0_21, %c0_22] : memref<1x5xf32, #tpu.memory_space<vmem>>, vector<1x5xf32>
    %20 = vector.broadcast %19 : vector<1x5xf32> to vector<8x5xf32>
    %21 = arith.addf %18, %20 : vector<8x5xf32>
    %c0_23 = arith.constant 0 : index
    %c0_24 = arith.constant 0 : index
    %c0_25 = arith.constant 0 : index
    %c0_26 = arith.constant 0 : index
    %22 = vector.load %arg12[%c0_23, %c0_24, %c0_25, %c0_26] : memref<1x3x8x5xf32, #tpu.memory_space<vmem>>, vector<1x1x8x5xf32>
    %23 = vector.shape_cast %22 : vector<1x1x8x5xf32> to vector<8x5xf32>
    %24 = vector.shape_cast %21 : vector<8x5xf32> to vector<1x1x8x5xf32>
    tpu.vector_store %arg12[%c0_23, %c0_24, %c0_25, %c0_26], %24 {strides = array<i32>} : memref<1x3x8x5xf32, #tpu.memory_space<vmem>>, vector<1x1x8x5xf32>,
    %25 = arith.mulf %5, %5 : vector<8x8xf32>
    %cst_27 = arith.constant dense<0.000000e+00> : vector<8xf32>
    %26 = vector.multi_reduction <add>, %25, %cst_27 [1] : vector<8x8xf32> to vector<8xf32>
    %27 = vector.shape_cast %26 : vector<8xf32> to vector<8x1xf32>
    %cst_28 = arith.constant 9.99999996E-13 : f32
    %28 = vector.broadcast %cst_28 : f32 to vector<8x1xf32>
    %29 = arith.addf %27, %28 : vector<8x1xf32>
    %30 = math.rsqrt %29 : vector<8x1xf32>
    %31 = vector.broadcast %30 : vector<8x1xf32> to vector<8x8xf32>
    %32 = arith.mulf %5, %31 : vector<8x8xf32>
    %cst_29 = arith.constant dense<0.000000e+00> : vector<8x8xf32>
    %33 = tpu.matmul %32, %32, %cst_29 {dimension_numbers = #tpu.dot_dimension_numbers<[1], [1], [0], [0], [0, 0, 1, 0], [], []>} : vector<8x8xf32>, vector<8x8xf32>, vector<8x8xf32> -> vector<8x8xf32>
    %34 = math.exp %33 : vector<8x8xf32>
    %cst_30 = arith.constant dense<0.000000e+00> : vector<8xf32>
    %35 = vector.multi_reduction <add>, %34, %cst_30 [1] : vector<8x8xf32> to vector<8xf32>
    %36 = vector.shape_cast %35 : vector<8xf32> to vector<8x1xf32>
    %37 = tpu.reciprocal %36 {approx = true} : vector<8x1xf32> -> vector<8x1xf32>
    %38 = vector.broadcast %37 : vector<8x1xf32> to vector<8x8xf32>
    %39 = arith.mulf %34, %38 : vector<8x8xf32>
    %cst_31 = arith.constant dense<0.000000e+00> : vector<8x16xf32>
    %40 = tpu.matmul %39, %16, %cst_31 {dimension_numbers = #tpu.dot_dimension_numbers<[1], [0], [0], [1], [0, 0, 1, 1], [], []>} : vector<8x8xf32>, vector<8x16xf32>, vector<8x16xf32> -> vector<8x16xf32>
    %41 = arith.mulf %40, %40 : vector<8x16xf32>
    %42 = vector.shape_cast %41 : vector<8x16xf32> to vector<1x8x16xf32>
    %cst_32 = arith.constant dense<0.000000e+00> : vector<1xf32>
    %43 = vector.multi_reduction <add>, %42, %cst_32 [1, 2] : vector<1x8x16xf32> to vector<1xf32>
    %44 = vector.shape_cast %43 : vector<1xf32> to vector<1x1x1xf32>
    %45 = vector.extract %44[0, 0, 0] : f32 from vector<1x1x1xf32>
    %46 = vector.broadcast %45 : f32 to vector<1x1xf32>
    %c0_33 = arith.constant 0 : index
    %c0_34 = arith.constant 0 : index
    %47 = vector.load %arg9[%c0_33, %c0_34] : memref<16x5xf32, #tpu.memory_space<vmem>>, vector<16x5xf32>
    %cst_35 = arith.constant dense<0.000000e+00> : vector<8x5xf32>
    %48 = tpu.matmul %40, %47, %cst_35 {dimension_numbers = #tpu.dot_dimension_numbers<[1], [0], [0], [1], [0, 0, 1, 1], [], []>} : vector<8x16xf32>, vector<16x5xf32>, vector<8x5xf32> -> vector<8x5xf32>
    %c0_36 = arith.constant 0 : index
    %c1 = arith.constant 1 : index
    %c0_37 = arith.constant 0 : index
    %c0_38 = arith.constant 0 : index
    %49 = vector.load %arg12[%c0_36, %c1, %c0_37, %c0_38] : memref<1x3x8x5xf32, #tpu.memory_space<vmem>>, vector<1x1x8x5xf32>
    %50 = vector.shape_cast %49 : vector<1x1x8x5xf32> to vector<8x5xf32>
    %51 = vector.shape_cast %48 : vector<8x5xf32> to vector<1x1x8x5xf32>
    tpu.vector_store %arg12[%c0_36, %c1, %c0_37, %c0_38], %51 {strides = array<i32>} : memref<1x3x8x5xf32, #tpu.memory_space<vmem>>, vector<1x1x8x5xf32>,
    %52 = arith.mulf %10, %10 : vector<8x8xf32>
    %cst_39 = arith.constant dense<0.000000e+00> : vector<8xf32>
    %53 = vector.multi_reduction <add>, %52, %cst_39 [1] : vector<8x8xf32> to vector<8xf32>
    %54 = vector.shape_cast %53 : vector<8xf32> to vector<8x1xf32>
    %cst_40 = arith.constant 9.99999996E-13 : f32
    %55 = vector.broadcast %cst_40 : f32 to vector<8x1xf32>
    %56 = arith.addf %54, %55 : vector<8x1xf32>
    %57 = math.rsqrt %56 : vector<8x1xf32>
    %58 = vector.broadcast %57 : vector<8x1xf32> to vector<8x8xf32>
    %59 = arith.mulf %10, %58 : vector<8x8xf32>
    %cst_41 = arith.constant dense<0.000000e+00> : vector<8x8xf32>
    %60 = tpu.matmul %59, %59, %cst_41 {dimension_numbers = #tpu.dot_dimension_numbers<[1], [1], [0], [0], [0, 0, 1, 0], [], []>} : vector<8x8xf32>, vector<8x8xf32>, vector<8x8xf32> -> vector<8x8xf32>
    %61 = math.exp %60 : vector<8x8xf32>
    %cst_42 = arith.constant dense<0.000000e+00> : vector<8xf32>
    %62 = vector.multi_reduction <add>, %61, %cst_42 [1] : vector<8x8xf32> to vector<8xf32>
    %63 = vector.shape_cast %62 : vector<8xf32> to vector<8x1xf32>
    %64 = tpu.reciprocal %63 {approx = true} : vector<8x1xf32> -> vector<8x1xf32>
    %65 = vector.broadcast %64 : vector<8x1xf32> to vector<8x8xf32>
    %66 = arith.mulf %61, %65 : vector<8x8xf32>
    %cst_43 = arith.constant dense<0.000000e+00> : vector<8x16xf32>
    %67 = tpu.matmul %66, %16, %cst_43 {dimension_numbers = #tpu.dot_dimension_numbers<[1], [0], [0], [1], [0, 0, 1, 1], [], []>} : vector<8x8xf32>, vector<8x16xf32>, vector<8x16xf32> -> vector<8x16xf32>
    %68 = arith.mulf %67, %67 : vector<8x16xf32>
    %69 = vector.shape_cast %68 : vector<8x16xf32> to vector<1x8x16xf32>
    %cst_44 = arith.constant dense<0.000000e+00> : vector<1xf32>
    %70 = vector.multi_reduction <add>, %69, %cst_44 [1, 2] : vector<1x8x16xf32> to vector<1xf32>
    %71 = vector.shape_cast %70 : vector<1xf32> to vector<1x1x1xf32>
    %72 = vector.extract %71[0, 0, 0] : f32 from vector<1x1x1xf32>
    %73 = vector.broadcast %72 : f32 to vector<1x1xf32>
    %c0_45 = arith.constant 0 : index
    %c0_46 = arith.constant 0 : index
    %74 = vector.load %arg10[%c0_45, %c0_46] : memref<16x5xf32, #tpu.memory_space<vmem>>, vector<16x5xf32>
    %cst_47 = arith.constant dense<0.000000e+00> : vector<8x5xf32>
    %75 = tpu.matmul %67, %74, %cst_47 {dimension_numbers = #tpu.dot_dimension_numbers<[1], [0], [0], [1], [0, 0, 1, 1], [], []>} : vector<8x16xf32>, vector<16x5xf32>, vector<8x5xf32> -> vector<8x5xf32>
    %c0_48 = arith.constant 0 : index
    %c2 = arith.constant 2 : index
    %c0_49 = arith.constant 0 : index
    %c0_50 = arith.constant 0 : index
    %76 = vector.load %arg12[%c0_48, %c2, %c0_49, %c0_50] : memref<1x3x8x5xf32, #tpu.memory_space<vmem>>, vector<1x1x8x5xf32>
    %77 = vector.shape_cast %76 : vector<1x1x8x5xf32> to vector<8x5xf32>
    %78 = vector.shape_cast %75 : vector<8x5xf32> to vector<1x1x8x5xf32>
    tpu.vector_store %arg12[%c0_48, %c2, %c0_49, %c0_50], %78 {strides = array<i32>} : memref<1x3x8x5xf32, #tpu.memory_space<vmem>>, vector<1x1x8x5xf32>,
    %79 = tpu.concatenate %46, %73 in 1 : vector<1x1xf32>, vector<1x1xf32> -> vector<1x2xf32>
    %c0_51 = arith.constant 0 : index
    %c0_52 = arith.constant 0 : index
    %c0_53 = arith.constant 0 : index
    %80 = vector.load %arg13[%c0_51, %c0_52, %c0_53] : memref<1x1x2xf32, #tpu.memory_space<vmem>>, vector<1x1x2xf32>
    %81 = vector.shape_cast %80 : vector<1x1x2xf32> to vector<1x2xf32>
    %82 = vector.shape_cast %79 : vector<1x2xf32> to vector<1x1x2xf32>
    tpu.vector_store %arg13[%c0_51, %c0_52, %c0_53], %82 {strides = array<i32>} : memref<1x1x2xf32, #tpu.memory_space<vmem>>, vector<1x1x2xf32>,
    return
  }
  func.func @transform_0(%arg0: i32) -> (i32, i32, i32) {
    %c0_i32 = arith.constant 0 : i32
    %c0_i32_0 = arith.constant 0 : i32
    %c0_i32_1 = arith.constant 0 : i32
    return %arg0, %c0_i32, %c0_i32_0 : i32, i32, i32
  }
  func.func @transform_1(%arg0: i32) -> (i32, i32, i32) {
    %c0_i32 = arith.constant 0 : i32
    %c0_i32_0 = arith.constant 0 : i32
    %c0_i32_1 = arith.constant 0 : i32
    return %arg0, %c0_i32, %c0_i32_0 : i32, i32, i32
  }
  func.func @transform_2(%arg0: i32) -> (i32, i32, i32) {
    %c0_i32 = arith.constant 0 : i32
    %c0_i32_0 = arith.constant 0 : i32
    %c0_i32_1 = arith.constant 0 : i32
    return %arg0, %c0_i32, %c0_i32_0 : i32, i32, i32
  }
  func.func @transform_3(%arg0: i32) -> (i32, i32) {
    %c0_i32 = arith.constant 0 : i32
    %c0_i32_0 = arith.constant 0 : i32
    %c0_i32_1 = arith.constant 0 : i32
    return %c0_i32, %c0_i32_0 : i32, i32
  }
  func.func @transform_4(%arg0: i32) -> (i32, i32) {
    %c0_i32 = arith.constant 0 : i32
    %c0_i32_0 = arith.constant 0 : i32
    %c0_i32_1 = arith.constant 0 : i32
    return %c0_i32, %c0_i32_0 : i32, i32
  }
  func.func @transform_5(%arg0: i32) -> (i32, i32) {
    %c0_i32 = arith.constant 0 : i32
    %c0_i32_0 = arith.constant 0 : i32
    %c0_i32_1 = arith.constant 0 : i32
    return %c0_i32, %c0_i32_0 : i32, i32
  }
  func.func @transform_6(%arg0: i32) -> (i32, i32) {
    %c0_i32 = arith.constant 0 : i32
    %c0_i32_0 = arith.constant 0 : i32
    %c0_i32_1 = arith.constant 0 : i32
    return %c0_i32, %c0_i32_0 : i32, i32
  }
  func.func @transform_7(%arg0: i32) -> (i32, i32) {
    %c0_i32 = arith.constant 0 : i32
    %c0_i32_0 = arith.constant 0 : i32
    %c0_i32_1 = arith.constant 0 : i32
    return %c0_i32, %c0_i32_0 : i32, i32
  }
  func.func @transform_8(%arg0: i32) -> (i32, i32) {
    %c0_i32 = arith.constant 0 : i32
    %c0_i32_0 = arith.constant 0 : i32
    %c0_i32_1 = arith.constant 0 : i32
    return %c0_i32, %c0_i32_0 : i32, i32
  }
  func.func @transform_9(%arg0: i32) -> (i32, i32) {
    %c0_i32 = arith.constant 0 : i32
    %c0_i32_0 = arith.constant 0 : i32
    %c0_i32_1 = arith.constant 0 : i32
    return %c0_i32, %c0_i32_0 : i32, i32
  }
  func.func @transform_10(%arg0: i32) -> (i32, i32) {
    %c0_i32 = arith.constant 0 : i32
    %c0_i32_0 = arith.constant 0 : i32
    %c0_i32_1 = arith.constant 0 : i32
    return %c0_i32, %c0_i32_0 : i32, i32
  }
  func.func @transform_11(%arg0: i32) -> (i32, i32, i32, i32) {
    %c0_i32 = arith.constant 0 : i32
    %c0_i32_0 = arith.constant 0 : i32
    %c0_i32_1 = arith.constant 0 : i32
    %c0_i32_2 = arith.constant 0 : i32
    return %arg0, %c0_i32, %c0_i32_0, %c0_i32_1 : i32, i32, i32, i32
  }
  func.func @transform_12(%arg0: i32) -> (i32, i32, i32) {
    %c0_i32 = arith.constant 0 : i32
    %c0_i32_0 = arith.constant 0 : i32
    %c0_i32_1 = arith.constant 0 : i32
    return %arg0, %c0_i32, %c0_i32_0 : i32, i32, i32
  }
}

</mosaic_0001>

<llo_original>
// kernel: tagger_forward.1
$region0: #{tagger_forward.1}
  #allocation0 [shape = 'u32[]', space=smem, size = 0x4, offset = 0x4, fixed_abs, tag = 'smem constant byte address 0x4 - core index']
  #allocation1 [shape = 'u32[144,128]{1,0:T(1,128)}', space=vmem, size = 0x12000, scoped, tag = 'internal scratch']
  %s0 = inlined_call_operand.vmem [shape: f32[2,8,8], index: 0, kind: input, shape index: {}]
  %s1 = inlined_call_operand.vmem [shape: f32[2,8,8], index: 1, kind: input, shape index: {}]
  %s2 = inlined_call_operand.vmem [shape: f32[2,8,8], index: 2, kind: input, shape index: {}]
  %s3 = inlined_call_operand.vmem [shape: f32[8,16], index: 3, kind: input, shape index: {}]
  %s4 = inlined_call_operand.vmem [shape: f32[8,16], index: 4, kind: input, shape index: {}]
  %s5 = inlined_call_operand.vmem [shape: f32[8,16], index: 5, kind: input, shape index: {}]
  %s6 = inlined_call_operand.vmem [shape: f32[1,16], index: 6, kind: input, shape index: {}]
  %s7 = inlined_call_operand.vmem [shape: f32[16,5], index: 7, kind: input, shape index: {}]
  %s8 = inlined_call_operand.vmem [shape: f32[16,5], index: 8, kind: input, shape index: {}]
  %s9 = inlined_call_operand.vmem [shape: f32[16,5], index: 9, kind: input, shape index: {}]
  %s10 = inlined_call_operand.vmem [shape: f32[1,5], index: 10, kind: input, shape index: {}]
  %s11 = inlined_call_operand.vmem [shape: f32[2,3,8,5], index: 11, kind: output, shape index: {0}]
  %s12 = inlined_call_operand.vmem [shape: f32[2,1,2], index: 12, kind: output, shape index: {1}]
  %13 = xla_tuple %s11, %s12
  %s14 = sld [smem:[#allocation0]]
  $region85: #{tagger_forward.1} parent=0
    _
  %s16 = ssub.s32 1, %s14
  %s17 = scalar_select 0, %s16, %s14
  loop: start=0, step=1, limit=4
  $region2: #{tagger_forward.1} parent=0 // loop_pre_header
    _
  $region3: #{tagger_forward.1} parent=0 // loop_header
    %s19 = sphi 0, %s23
    %p20 = scmp.ge.s32.totalorder %s19, 4
    %s29 = sphi 0, %s31
    %s32 = sphi 0, %s29
    %s33 = sphi 0, %s32
    %s49 = sphi 0, %s33
    %s55 = sphi 0, %s57
    %s58 = sphi 0, %s55
    %s59 = sphi 0, %s58
    %s75 = sphi 0, %s59
    %s81 = sphi 0, %s83
    %s84 = sphi 0, %s81
    %s85 = sphi 0, %s84
    %s101 = sphi 0, %s85
    %s105 = sphi 0, %s105
    %s107 = sphi 0, %s105
    %s108 = sphi 0, %s107
    %s122 = sphi 0, %s108
    %s126 = sphi 0, %s126
    %s128 = sphi 0, %s126
    %s129 = sphi 0, %s128
    %s143 = sphi 0, %s129
    %s147 = sphi 0, %s147
    %s149 = sphi 0, %s147
    %s150 = sphi 0, %s149
    %s164 = sphi 0, %s150
    %s168 = sphi 0, %s168
    %s170 = sphi 0, %s168
    %s171 = sphi 0, %s170
    %s185 = sphi 0, %s171
    %s189 = sphi 0, %s189
    %s191 = sphi 0, %s189
    %s192 = sphi 0, %s191
    %s206 = sphi 0, %s192
    %s210 = sphi 0, %s210
    %s212 = sphi 0, %s210
    %s213 = sphi 0, %s212
    %s227 = sphi 0, %s213
    %s231 = sphi 0, %s231
    %s233 = sphi 0, %s231
    %s234 = sphi 0, %s233
    %s248 = sphi 0, %s234
    %s252 = sphi 0, %s252
    %s254 = sphi 0, %s252
    %s255 = sphi 0, %s254
    %s269 = sphi 0, %s255
    %s275 = sphi 0, %s277
    %s278 = sphi 0, %s275
    %s279 = sphi 0, %s278
    %s295 = sphi 0, %s279
    %s301 = sphi 0, %s303
    %s304 = sphi 0, %s301
    %s305 = sphi 0, %s304
    %s321 = sphi 0, %s305
  $region4: #{tagger_forward.1} parent=0 // loop_header_branch
    %22 = sbr.rel (%p20) target = $region8
  $region5: #{tagger_forward.1} parent=0 // loop_body
    %s24 = ssub.s32 %s19, 1
    %s25 = ssub.s32 %s19, 2
    %s26 = sadd.s32 %s19, 1
    %s27 = ssub.s32 %s19, %s26
    %p28 = scmp.eq.s32.totalorder %s27, 0
    %s30 = sadd.s32 %s29, 1
    %s31 = scalar_select %p28, %s29, %s30
    %p34 = pneg %p28
    %p35 = scmp.eq.s32.totalorder %s19, 1
    %p36 = por %p34, %p35
    %p37 = scmp.ne.s32.totalorder %s29, %s32
    %p38 = scmp.eq.s32.totalorder %s19, 0
    %p39 = por %p37, %p38
    %p40 = scmp.ne.s32.totalorder %s29, %s32
    %p41 = scmp.eq.s32.totalorder %s24, 1
    %p42 = por %p40, %p41
    %p43 = scmp.ne.s32.totalorder %s32, %s33
    %p44 = scmp.eq.s32.totalorder %s24, 0
    %p45 = por %p43, %p44
    %p46 = scmp.ne.s32.totalorder %s32, %s33
    %p47 = scmp.eq.s32.totalorder %s25, 1
    %p48 = por %p46, %p47
    %p50 = scmp.ne.s32.totalorder %s33, %s49
    %p51 = scmp.eq.s32.totalorder %s25, 0
    %p52 = por %p50, %p51
    %s53 = ssub.s32 %s19, %s26
    %p54 = scmp.eq.s32.totalorder %s53, 0
    %s56 = sadd.s32 %s55, 1
    %s57 = scalar_select %p54, %s55, %s56
    %p60 = pneg %p54
    %p61 = scmp.eq.s32.totalorder %s19, 1
    %p62 = por %p60, %p61
    %p63 = scmp.ne.s32.totalorder %s55, %s58
    %p64 = scmp.eq.s32.totalorder %s19, 0
    %p65 = por %p63, %p64
    %p66 = scmp.ne.s32.totalorder %s55, %s58
    %p67 = scmp.eq.s32.totalorder %s24, 1
    %p68 = por %p66, %p67
    %p69 = scmp.ne.s32.totalorder %s58, %s59
    %p70 = scmp.eq.s32.totalorder %s24, 0
    %p71 = por %p69, %p70
    %p72 = scmp.ne.s32.totalorder %s58, %s59
    %p73 = scmp.eq.s32.totalorder %s25, 1
    %p74 = por %p72, %p73
    %p76 = scmp.ne.s32.totalorder %s59, %s75
    %p77 = scmp.eq.s32.totalorder %s25, 0
    %p78 = por %p76, %p77
    %s79 = ssub.s32 %s19, %s26
    %p80 = scmp.eq.s32.totalorder %s79, 0
    %s82 = sadd.s32 %s81, 1
    %s83 = scalar_select %p80, %s81, %s82
    %p86 = pneg %p80
    %p87 = scmp.eq.s32.totalorder %s19, 1
    %p88 = por %p86, %p87
    %p89 = scmp.ne.s32.totalorder %s81, %s84
    %p90 = scmp.eq.s32.totalorder %s19, 0
    %p91 = por %p89, %p90
    %p92 = scmp.ne.s32.totalorder %s81, %s84
    %p93 = scmp.eq.s32.totalorder %s24, 1
    %p94 = por %p92, %p93
    %p95 = scmp.ne.s32.totalorder %s84, %s85
    %p96 = scmp.eq.s32.totalorder %s24, 0
    %p97 = por %p95, %p96
    %p98 = scmp.ne.s32.totalorder %s84, %s85
    %p99 = scmp.eq.s32.totalorder %s25, 1
    %p100 = por %p98, %p99
    %p102 = scmp.ne.s32.totalorder %s85, %s101
    %p103 = scmp.eq.s32.totalorder %s25, 0
    %p104 = por %p102, %p103
    %s106 = sadd.s32 %s105, 1
    %p109 = scmp.eq.s32.totalorder %s19, 1
    %p110 = scmp.ne.s32.totalorder %s105, %s107
    %p111 = scmp.eq.s32.totalorder %s19, 0
    %p112 = por %p110, %p111
    %p113 = scmp.ne.s32.totalorder %s105, %s107
    %p114 = scmp.eq.s32.totalorder %s24, 1
    %p115 = por %p113, %p114
    %p116 = scmp.ne.s32.totalorder %s107, %s108
    %p117 = scmp.eq.s32.totalorder %s24, 0
    %p118 = por %p116, %p117
    %p119 = scmp.ne.s32.totalorder %s107, %s108
    %p120 = scmp.eq.s32.totalorder %s25, 1
    %p121 = por %p119, %p120
    %p123 = scmp.ne.s32.totalorder %s108, %s122
    %p124 = scmp.eq.s32.totalorder %s25, 0
    %p125 = por %p123, %p124
    %s127 = sadd.s32 %s126, 1
    %p130 = scmp.eq.s32.totalorder %s19, 1
    %p131 = scmp.ne.s32.totalorder %s126, %s128
    %p132 = scmp.eq.s32.totalorder %s19, 0
    %p133 = por %p131, %p132
    %p134 = scmp.ne.s32.totalorder %s126, %s128
    %p135 = scmp.eq.s32.totalorder %s24, 1
    %p136 = por %p134, %p135
    %p137 = scmp.ne.s32.totalorder %s128, %s129
    %p138 = scmp.eq.s32.totalorder %s24, 0
    %p139 = por %p137, %p138
    %p140 = scmp.ne.s32.totalorder %s128, %s129
    %p141 = scmp.eq.s32.totalorder %s25, 1
    %p142 = por %p140, %p141
    %p144 = scmp.ne.s32.totalorder %s129, %s143
    %p145 = scmp.eq.s32.totalorder %s25, 0
    %p146 = por %p144, %p145
    %s148 = sadd.s32 %s147, 1
    %p151 = scmp.eq.s32.totalorder %s19, 1
    %p152 = scmp.ne.s32.totalorder %s147, %s149
    %p153 = scmp.eq.s32.totalorder %s19, 0
    %p154 = por %p152, %p153
    %p155 = scmp.ne.s32.totalorder %s147, %s149
    %p156 = scmp.eq.s32.totalorder %s24, 1
    %p157 = por %p155, %p156
    %p158 = scmp.ne.s32.totalorder %s149, %s150
    %p159 = scmp.eq.s32.totalorder %s24, 0
    %p160 = por %p158, %p159
    %p161 = scmp.ne.s32.totalorder %s149, %s150
    %p162 = scmp.eq.s32.totalorder %s25, 1
    %p163 = por %p161, %p162
    %p165 = scmp.ne.s32.totalorder %s150, %s164
    %p166 = scmp.eq.s32.totalorder %s25, 0
    %p167 = por %p165, %p166
    %s169 = sadd.s32 %s168, 1
    %p172 = scmp.eq.s32.totalorder %s19, 1
    %p173 = scmp.ne.s32.totalorder %s168, %s170
    %p174 = scmp.eq.s32.totalorder %s19, 0
    %p175 = por %p173, %p174
    %p176 = scmp.ne.s32.totalorder %s168, %s170
    %p177 = scmp.eq.s32.totalorder %s24, 1
    %p178 = por %p176, %p177
    %p179 = scmp.ne.s32.totalorder %s170, %s171
    %p180 = scmp.eq.s32.totalorder %s24, 0
    %p181 = por %p179, %p180
    %p182 = scmp.ne.s32.totalorder %s170, %s171
    %p183 = scmp.eq.s32.totalorder %s25, 1
    %p184 = por %p182, %p183
    %p186 = scmp.ne.s32.totalorder %s171, %s185
    %p187 = scmp.eq.s32.totalorder %s25, 0
    %p188 = por %p186, %p187
    %s190 = sadd.s32 %s189, 1
    %p193 = scmp.eq.s32.totalorder %s19, 1
    %p194 = scmp.ne.s32.totalorder %s189, %s191
    %p195 = scmp.eq.s32.totalorder %s19, 0
    %p196 = por %p194, %p195
    %p197 = scmp.ne.s32.totalorder %s189, %s191
    %p198 = scmp.eq.s32.totalorder %s24, 1
    %p199 = por %p197, %p198
    %p200 = scmp.ne.s32.totalorder %s191, %s192
    %p201 = scmp.eq.s32.totalorder %s24, 0
    %p202 = por %p200, %p201
    %p203 = scmp.ne.s32.totalorder %s191, %s192
    %p204 = scmp.eq.s32.totalorder %s25, 1
    %p205 = por %p203, %p204
    %p207 = scmp.ne.s32.totalorder %s192, %s206
    %p208 = scmp.eq.s32.totalorder %s25, 0
    %p209 = por %p207, %p208
    %s211 = sadd.s32 %s210, 1
    %p214 = scmp.eq.s32.totalorder %s19, 1
    %p215 = scmp.ne.s32.totalorder %s210, %s212
    %p216 = scmp.eq.s32.totalorder %s19, 0
    %p217 = por %p215, %p216
    %p218 = scmp.ne.s32.totalorder %s210, %s212
    %p219 = scmp.eq.s32.totalorder %s24, 1
    %p220 = por %p218, %p219
    %p221 = scmp.ne.s32.totalorder %s212, %s213
    %p222 = scmp.eq.s32.totalorder %s24, 0
    %p223 = por %p221, %p222
    %p224 = scmp.ne.s32.totalorder %s212, %s213
    %p225 = scmp.eq.s32.totalorder %s25, 1
    %p226 = por %p224, %p225
    %p228 = scmp.ne.s32.totalorder %s213, %s227
    %p229 = scmp.eq.s32.totalorder %s25, 0
    %p230 = por %p228, %p229
    %s232 = sadd.s32 %s231, 1
    %p235 = scmp.eq.s32.totalorder %s19, 1
    %p236 = scmp.ne.s32.totalorder %s231, %s233
    %p237 = scmp.eq.s32.totalorder %s19, 0
    %p238 = por %p236, %p237
    %p239 = scmp.ne.s32.totalorder %s231, %s233
    %p240 = scmp.eq.s32.totalorder %s24, 1
    %p241 = por %p239, %p240
    %p242 = scmp.ne.s32.totalorder %s233, %s234
    %p243 = scmp.eq.s32.totalorder %s24, 0
    %p244 = por %p242, %p243
    %p245 = scmp.ne.s32.totalorder %s233, %s234
    %p246 = scmp.eq.s32.totalorder %s25, 1
    %p247 = por %p245, %p246
    %p249 = scmp.ne.s32.totalorder %s234, %s248
    %p250 = scmp.eq.s32.totalorder %s25, 0
    %p251 = por %p249, %p250
    %s253 = sadd.s32 %s252, 1
    %p256 = scmp.eq.s32.totalorder %s19, 1
    %p257 = scmp.ne.s32.totalorder %s252, %s254
    %p258 = scmp.eq.s32.totalorder %s19, 0
    %p259 = por %p257, %p258
    %p260 = scmp.ne.s32.totalorder %s252, %s254
    %p261 = scmp.eq.s32.totalorder %s24, 1
    %p262 = por %p260, %p261
    %p263 = scmp.ne.s32.totalorder %s254, %s255
    %p264 = scmp.eq.s32.totalorder %s24, 0
    %p265 = por %p263, %p264
    %p266 = scmp.ne.s32.totalorder %s254, %s255
    %p267 = scmp.eq.s32.totalorder %s25, 1
    %p268 = por %p266, %p267
    %p270 = scmp.ne.s32.totalorder %s255, %s269
    %p271 = scmp.eq.s32.totalorder %s25, 0
    %p272 = por %p270, %p271
    %s273 = ssub.s32 %s19, %s26
    %p274 = scmp.eq.s32.totalorder %s273, 0
    %s276 = sadd.s32 %s275, 1
    %s277 = scalar_select %p274, %s275, %s276
    %p280 = pneg %p274
    %p281 = scmp.eq.s32.totalorder %s19, 1
    %p282 = por %p280, %p281
    %p283 = scmp.ne.s32.totalorder %s275, %s278
    %p284 = scmp.eq.s32.totalorder %s19, 0
    %p285 = por %p283, %p284
    %p286 = scmp.ne.s32.totalorder %s275, %s278
    %p287 = scmp.eq.s32.totalorder %s24, 1
    %p288 = por %p286, %p287
    %p289 = scmp.ne.s32.totalorder %s278, %s279
    %p290 = scmp.eq.s32.totalorder %s24, 0
    %p291 = por %p289, %p290
    %p292 = scmp.ne.s32.totalorder %s278, %s279
    %p293 = scmp.eq.s32.totalorder %s25, 1
    %p294 = por %p292, %p293
    %p296 = scmp.ne.s32.totalorder %s279, %s295
    %p297 = scmp.eq.s32.totalorder %s25, 0
    %p298 = por %p296, %p297
    %s299 = ssub.s32 %s19, %s26
    %p300 = scmp.eq.s32.totalorder %s299, 0
    %s302 = sadd.s32 %s301, 1
    %s303 = scalar_select %p300, %s301, %s302
    %p306 = pneg %p300
    %p307 = scmp.eq.s32.totalorder %s19, 1
    %p308 = por %p306, %p307
    %p309 = scmp.ne.s32.totalorder %s301, %s304
    %p310 = scmp.eq.s32.totalorder %s19, 0
    %p311 = por %p309, %p310
    %p312 = scmp.ne.s32.totalorder %s301, %s304
    %p313 = scmp.eq.s32.totalorder %s24, 1
    %p314 = por %p312, %p313
    %p315 = scmp.ne.s32.totalorder %s304, %s305
    %p316 = scmp.eq.s32.totalorder %s24, 0
    %p317 = por %p315, %p316
    %p318 = scmp.ne.s32.totalorder %s304, %s305
    %p319 = scmp.eq.s32.totalorder %s25, 1
    %p320 = por %p318, %p319
    %p322 = scmp.ne.s32.totalorder %s305, %s321
    %p323 = scmp.eq.s32.totalorder %s25, 0
    %p324 = por %p322, %p323
    %p325 = scmp.le.s32.totalorder 1, %s19
    %p326 = scmp.lt.s32.totalorder %s19, 3
    %p327 = pnand %p325, %p326
    %p328 = pneg %p327
    // Predicated region
    $region9: #{tagger_forward.1} parent=5 // pred_check
      _
    $region10: #{tagger_forward.1} parent=5 // pred_check_branch
      %330 = sbr.rel (%p327) target = $region12
    $region11: #{tagger_forward.1} parent=5 // pred_region
      %s331 = ssub.s32 %s19, 1
      // Predicated region
      $region13: #{tagger_forward.1} parent=11 // pred_check
        %p332 = pneg %p118
      $region14: #{tagger_forward.1} parent=11 // pred_check_branch
        %334 = sbr.rel (%p332) target = $region16
      $region15: #{tagger_forward.1} parent=11 // pred_region
        _
      $region16: #{tagger_forward.1} parent=11 // pred_fallthru
        _
      // Predicated region
      $region17: #{tagger_forward.1} parent=11 // pred_check
        %p335 = pneg %p139
      $region18: #{tagger_forward.1} parent=11 // pred_check_branch
        %337 = sbr.rel (%p335) target = $region20
      $region19: #{tagger_forward.1} parent=11 // pred_region
        _
      $region20: #{tagger_forward.1} parent=11 // pred_fallthru
        _
      // Predicated region
      $region21: #{tagger_forward.1} parent=11 // pred_check
        %p338 = pneg %p160
      $region22: #{tagger_forward.1} parent=11 // pred_check_branch
        %340 = sbr.rel (%p338) target = $region24
      $region23: #{tagger_forward.1} parent=11 // pred_region
        _
      $region24: #{tagger_forward.1} parent=11 // pred_fallthru
        _
      // Predicated region
      $region25: #{tagger_forward.1} parent=11 // pred_check
        %p341 = pneg %p181
      $region26: #{tagger_forward.1} parent=11 // pred_check_branch
        %343 = sbr.rel (%p341) target = $region28
      $region27: #{tagger_forward.1} parent=11 // pred_region
        _
      $region28: #{tagger_forward.1} parent=11 // pred_fallthru
        _
      // Predicated region
      $region29: #{tagger_forward.1} parent=11 // pred_check
        %p344 = pneg %p202
      $region30: #{tagger_forward.1} parent=11 // pred_check_branch
        %346 = sbr.rel (%p344) target = $region32
      $region31: #{tagger_forward.1} parent=11 // pred_region
        _
      $region32: #{tagger_forward.1} parent=11 // pred_fallthru
        _
      // Predicated region
      $region33: #{tagger_forward.1} parent=11 // pred_check
        %p347 = pneg %p223
      $region34: #{tagger_forward.1} parent=11 // pred_check_branch
        %349 = sbr.rel (%p347) target = $region36
      $region35: #{tagger_forward.1} parent=11 // pred_region
        _
      $region36: #{tagger_forward.1} parent=11 // pred_fallthru
        _
      // Predicated region
      $region37: #{tagger_forward.1} parent=11 // pred_check
        %p350 = pneg %p244
      $region38: #{tagger_forward.1} parent=11 // pred_check_branch
        %352 = sbr.rel (%p350) target = $region40
      $region39: #{tagger_forward.1} parent=11 // pred_region
        _
      $region40: #{tagger_forward.1} parent=11 // pred_fallthru
        _
      // Predicated region
      $region41: #{tagger_forward.1} parent=11 // pred_check
        %p353 = pneg %p265
      $region42: #{tagger_forward.1} parent=11 // pred_check_branch
        %355 = sbr.rel (%p353) target = $region44
      $region43: #{tagger_forward.1} parent=11 // pred_region
        _
      $region44: #{tagger_forward.1} parent=11 // pred_fallthru
        _
    $region12: #{tagger_forward.1} parent=5 // pred_fallthru
      _
    %p356 = scmp.lt.s32.totalorder %s19, 2
    // Predicated region
    $region45: #{tagger_forward.1} parent=5 // pred_check
      %p357 = pneg %p356
    $region46: #{tagger_forward.1} parent=5 // pred_check_branch
      %359 = sbr.rel (%p357) target = $region48
    $region47: #{tagger_forward.1} parent=5 // pred_region
      // Predicated region
      $region49: #{tagger_forward.1} parent=47 // pred_check
        %p360 = pneg %p39
      $region50: #{tagger_forward.1} parent=47 // pred_check_branch
        %362 = sbr.rel (%p360) target = $region52
      $region51: #{tagger_forward.1} parent=47 // pred_region
        %p363 = scmp.lt.s32.totalorder %s19, 1
        %s364 = scalar_select %p363, %s19, 1
        %s365 = smul.addr %s364, 8
        %s366 = scalar_lea.vmem %s0, %s365
      $region52: #{tagger_forward.1} parent=47 // pred_fallthru
        _
      // Predicated region
      $region53: #{tagger_forward.1} parent=47 // pred_check
        %p367 = pneg %p65
      $region54: #{tagger_forward.1} parent=47 // pred_check_branch
        %369 = sbr.rel (%p367) target = $region56
      $region55: #{tagger_forward.1} parent=47 // pred_region
        %p370 = scmp.lt.s32.totalorder %s19, 1
        %s371 = scalar_select %p370, %s19, 1
        %s372 = smul.addr %s371, 8
        %s373 = scalar_lea.vmem %s1, %s372
      $region56: #{tagger_forward.1} parent=47 // pred_fallthru
        _
      // Predicated region
      $region57: #{tagger_forward.1} parent=47 // pred_check
        %p374 = pneg %p91
      $region58: #{tagger_forward.1} parent=47 // pred_check_branch
        %376 = sbr.rel (%p374) target = $region60
      $region59: #{tagger_forward.1} parent=47 // pred_region
        %p377 = scmp.lt.s32.totalorder %s19, 1
        %s378 = scalar_select %p377, %s19, 1
        %s379 = smul.addr %s378, 8
        %s380 = scalar_lea.vmem %s2, %s379
      $region60: #{tagger_forward.1} parent=47 // pred_fallthru
        _
    $region48: #{tagger_forward.1} parent=5 // pred_fallthru
      _
    %p381 = scmp.le.s32.totalorder 1, %s19
    %p382 = scmp.lt.s32.totalorder %s19, 3
    %p383 = pnand %p381, %p382
    %p384 = pneg %p383
    // Predicated region
    $region61: #{tagger_forward.1} parent=5 // pred_check
      _
    $region62: #{tagger_forward.1} parent=5 // pred_check_branch
      %386 = sbr.rel (%p383) target = $region64
    $region63: #{tagger_forward.1} parent=5 // pred_region
      %s387 = ssub.s32 %s19, 1
      %p388 = scmp.lt.s32.totalorder %s24, 1
      %s389 = scalar_select %p388, %s24, 1
      %s390 = smul.addr %s389, 8
      %s391 = scalar_lea.vmem %s0, %s390
      %p392 = pneg %p45
      %p393 = pneg %p42
      %p394 = scmp.lt.s32.totalorder %s24, 1
      %s395 = scalar_select %p394, %s24, 1
      %s396 = smul.addr %s395, 8
      %s397 = scalar_lea.vmem %s1, %s396
      %p398 = pneg %p71
      %p399 = pneg %p68
      %p400 = scmp.lt.s32.totalorder %s24, 1
      %s401 = scalar_select %p400, %s24, 1
      %s402 = smul.addr %s401, 8
      %s403 = scalar_lea.vmem %s2, %s402
      %p404 = pneg %p97
      %p405 = pneg %p94
      %p406 = pneg %p118
      %p407 = pneg %p115
      %p408 = pneg %p139
      %p409 = pneg %p136
      %p410 = pneg %p160
      %p411 = pneg %p157
      %p412 = pneg %p181
      %p413 = pneg %p178
      %p414 = pneg %p202
      %p415 = pneg %p199
      %p416 = pneg %p223
      %p417 = pneg %p220
      %p418 = pneg %p244
      %p419 = pneg %p241
      %p420 = pneg %p265
      %p421 = pneg %p262
      %p422 = pneg %p291
      %p423 = pneg %p288
      %p424 = scmp.lt.s32.totalorder %s24, 1
      %s425 = scalar_select %p424, %s24, 1
      %s426 = smul.addr %s425, 3
      %s427 = smul.addr %s426, 8
      %s428 = scalar_lea.vmem %s11, %s427
      %p429 = pneg %p317
      %p430 = pneg %p314
      %p431 = scmp.lt.s32.totalorder %s24, 1
      %s432 = scalar_select %p431, %s24, 1
      %s433 = scalar_lea.vmem %s12, %s432
      %p434 = scmp.lt.s32.totalorder %s24, 1
      %s435 = scalar_select %p434, %s24, 1
      %s436 = smul.addr %s435, 8
      %s437 = scalar_lea.vmem %s0, %s436
      %p438 = scmp.lt.s32.totalorder %s24, 1
      %s439 = scalar_select %p438, %s24, 1
      %s440 = smul.addr %s439, 8
      %s441 = scalar_lea.vmem %s1, %s440
      %p442 = scmp.lt.s32.totalorder %s24, 1
      %s443 = scalar_select %p442, %s24, 1
      %s444 = smul.addr %s443, 8
      %s445 = scalar_lea.vmem %s2, %s444
      %p446 = scmp.lt.s32.totalorder %s24, 1
      %s447 = scalar_select %p446, %s24, 1
      %s448 = smul.addr %s447, 3
      %s449 = smul.addr %s448, 8
      %s450 = scalar_lea.vmem %s11, %s449
      %p451 = scmp.lt.s32.totalorder %s24, 1
      %s452 = scalar_select %p451, %s24, 1
      %s453 = scalar_lea.vmem %s12, %s452
      %v454 = vld [vmem:[%s437] sm:$0xff]
      %v455 = vld [vmem:[%s3] sm:$0xff]
      %v456 = vld [vmem:[%s441] sm:$0xff]
      %v457 = vld [vmem:[%s4] sm:$0xff]
      %vm458 = vcmask 64512
      %v460 = vsel %vm458, %v456, 0
      %462 = vmatprep.subr.mxu0 0.0
      %463 = vmatpush1.msra.mxu0 %v457
      %464 = vmatprep.subr.mxu0 0.0
      %465 = vmatpush1.msra.mxu0 0.0
      %466 = vmatprep.subr.mxu0 0.0
      %467 = vmatpush1.msra.mxu0 0.0
      %468 = vmatprep.subr.mxu0 0.0
      %469 = vmatpush1.msra.mxu0 0.0
      %470 = vmatprep.subr.mxu0 0.0
      %471 = vmatpush1.msra.mxu0 0.0
      %472 = vmatprep.subr.mxu0 0.0
      %473 = vmatpush1.msra.mxu0 0.0
      %474 = vmatprep.subr.mxu0 0.0
      %475 = vmatpush1.msra.mxu0 0.0
      %476 = vmatprep.subr.mxu0 0.0
      %477 = vmatpush1.msra.mxu0 0.0
      %478 = vmatprep.subr.mxu0 0.0
      %479 = vmatpush1.msra.mxu0 0.0
      %480 = vmatprep.subr.mxu0 0.0
      %481 = vmatpush1.msra.mxu0 0.0
      %482 = vmatprep.subr.mxu0 0.0
      %483 = vmatpush1.msra.mxu0 0.0
      %484 = vmatprep.subr.mxu0 0.0
      %485 = vmatpush1.msra.mxu0 0.0
      %486 = vmatprep.subr.mxu0 0.0
      %487 = vmatpush1.msra.mxu0 0.0
      %488 = vmatprep.subr.mxu0 0.0
      %489 = vmatpush1.msra.mxu0 0.0
      %490 = vmatprep.subr.mxu0 0.0
      %491 = vmatpush1.msra.mxu0 0.0
      %492 = vmatprep.subr.mxu0 0.0
      %493 = vmatpush1.msra.mxu0 0.0
      %494 = vmatprep.subr.mxu0 0.0
      %495 = vmatpush1.msra.mxu0 0.0
      %496 = vmatprep.subr.mxu0 0.0
      %497 = vmatpush1.msra.mxu0 0.0
      %498 = vmatprep.subr.mxu0 0.0
      %499 = vmatpush1.msra.mxu0 0.0
      %500 = vmatprep.subr.mxu0 0.0
      %501 = vmatpush1.msra.mxu0 0.0
      %502 = vmatprep.subr.mxu0 0.0
      %503 = vmatpush1.msra.mxu0 0.0
      %504 = vmatprep.subr.mxu0 0.0
      %505 = vmatpush1.msra.mxu0 0.0
      %506 = vmatprep.subr.mxu0 0.0
      %507 = vmatpush1.msra.mxu0 0.0
      %508 = vmatprep.subr.mxu0 0.0
      %509 = vmatpush1.msra.mxu0 0.0
      %510 = vmatprep.subr.mxu0 0.0
      %511 = vmatpush1.msra.mxu0 0.0
      %512 = vmatprep.subr.mxu0 0.0
      %513 = vmatpush1.msra.mxu0 0.0
      %514 = vmatprep.subr.mxu0 0.0
      %515 = vmatpush1.msra.mxu0 0.0
      %516 = vmatprep.subr.mxu0 0.0
      %517 = vmatpush1.msra.mxu0 0.0
      %518 = vmatprep.subr.mxu0 0.0
      %519 = vmatpush1.msra.mxu0 0.0
      %520 = vmatprep.subr.mxu0 0.0
      %521 = vmatpush1.msra.mxu0 0.0
      %522 = vmatprep.subr.mxu0 0.0
      %523 = vmatpush1.msra.mxu0 0.0
      %524 = vmatprep.subr.mxu0 0.0
      %525 = vmatpush1.msra.mxu0 0.0
      %526 = vmatprep.mubr.f32.mxu0 0.0
      %527 = vmatmul.mubr.f32.gmra.mrb[0].mxu0 %v460
      %v528 = vpop.f32.mrb[0].mxu0
      %v529 = vadd.f32 0.0, %v528
      %v530 = vpop.f32.mrb[0].mxu0
      %531 = vdwg.mxu0
      %v533 = vsel %vm458, %v454, 0
      %535 = vmatprep.subr.mxu0 0.0
      %536 = vmatpush1.msra.mxu0 %v455
      %537 = vmatprep.subr.mxu0 0.0
      %538 = vmatpush1.msra.mxu0 0.0
      %539 = vmatprep.subr.mxu0 0.0
      %540 = vmatpush1.msra.mxu0 0.0
      %541 = vmatprep.subr.mxu0 0.0
      %542 = vmatpush1.msra.mxu0 0.0
      %543 = vmatprep.subr.mxu0 0.0
      %544 = vmatpush1.msra.mxu0 0.0
      %545 = vmatprep.subr.mxu0 0.0
      %546 = vmatpush1.msra.mxu0 0.0
      %547 = vmatprep.subr.mxu0 0.0
      %548 = vmatpush1.msra.mxu0 0.0
      %549 = vmatprep.subr.mxu0 0.0
      %550 = vmatpush1.msra.mxu0 0.0
      %551 = vmatprep.subr.mxu0 0.0
      %552 = vmatpush1.msra.mxu0 0.0
      %553 = vmatprep.subr.mxu0 0.0
      %554 = vmatpush1.msra.mxu0 0.0
      %555 = vmatprep.subr.mxu0 0.0
      %556 = vmatpush1.msra.mxu0 0.0
      %557 = vmatprep.subr.mxu0 0.0
      %558 = vmatpush1.msra.mxu0 0.0
      %559 = vmatprep.subr.mxu0 0.0
      %560 = vmatpush1.msra.mxu0 0.0
      %561 = vmatprep.subr.mxu0 0.0
      %562 = vmatpush1.msra.mxu0 0.0
      %563 = vmatprep.subr.mxu0 0.0
      %564 = vmatpush1.msra.mxu0 0.0
      %565 = vmatprep.subr.mxu0 0.0
      %566 = vmatpush1.msra.mxu0 0.0
      %567 = vmatprep.subr.mxu0 0.0
      %568 = vmatpush1.msra.mxu0 0.0
      %569 = vmatprep.subr.mxu0 0.0
      %570 = vmatpush1.msra.mxu0 0.0
      %571 = vmatprep.subr.mxu0 0.0
      %572 = vmatpush1.msra.mxu0 0.0
      %573 = vmatprep.subr.mxu0 0.0
      %574 = vmatpush1.msra.mxu0 0.0
      %575 = vmatprep.subr.mxu0 0.0
      %576 = vmatpush1.msra.mxu0 0.0
      %577 = vmatprep.subr.mxu0 0.0
      %578 = vmatpush1.msra.mxu0 0.0
      %579 = vmatprep.subr.mxu0 0.0
      %580 = vmatpush1.msra.mxu0 0.0
      %581 = vmatprep.subr.mxu0 0.0
      %582 = vmatpush1.msra.mxu0 0.0
      %583 = vmatprep.subr.mxu0 0.0
      %584 = vmatpush1.msra.mxu0 0.0
      %585 = vmatprep.subr.mxu0 0.0
      %586 = vmatpush1.msra.mxu0 0.0
      %587 = vmatprep.subr.mxu0 0.0
      %588 = vmatpush1.msra.mxu0 0.0
      %589 = vmatprep.subr.mxu0 0.0
      %590 = vmatpush1.msra.mxu0 0.0
      %591 = vmatprep.subr.mxu0 0.0
      %592 = vmatpush1.msra.mxu0 0.0
      %593 = vmatprep.subr.mxu0 0.0
      %594 = vmatpush1.msra.mxu0 0.0
      %595 = vmatprep.subr.mxu0 0.0
      %596 = vmatpush1.msra.mxu0 0.0
      %597 = vmatprep.subr.mxu0 0.0
      %598 = vmatpush1.msra.mxu0 0.0
      %599 = vmatprep.mubr.f32.mxu0 0.0
      %600 = vmatmul.mubr.f32.gmra.mrb[0].mxu0 %v533
      %v601 = vpop.f32.mrb[0].mxu0
      %v602 = vadd.f32 %v529, %v601
      %v603 = vpop.f32.mrb[0].mxu0
      %604 = vdwg.mxu0
      %v605 = vld [vmem:[%s445] sm:$0xff]
      %v606 = vld [vmem:[%s5] sm:$0xff]
      %v608 = vsel %vm458, %v605, 0
      %610 = vmatprep.subr.mxu0 0.0
      %611 = vmatpush1.msra.mxu0 %v606
      %612 = vmatprep.subr.mxu0 0.0
      %613 = vmatpush1.msra.mxu0 0.0
      %614 = vmatprep.subr.mxu0 0.0
      %615 = vmatpush1.msra.mxu0 0.0
      %616 = vmatprep.subr.mxu0 0.0
      %617 = vmatpush1.msra.mxu0 0.0
      %618 = vmatprep.subr.mxu0 0.0
      %619 = vmatpush1.msra.mxu0 0.0
      %620 = vmatprep.subr.mxu0 0.0
      %621 = vmatpush1.msra.mxu0 0.0
      %622 = vmatprep.subr.mxu0 0.0
      %623 = vmatpush1.msra.mxu0 0.0
      %624 = vmatprep.subr.mxu0 0.0
      %625 = vmatpush1.msra.mxu0 0.0
      %626 = vmatprep.subr.mxu0 0.0
      %627 = vmatpush1.msra.mxu0 0.0
      %628 = vmatprep.subr.mxu0 0.0
      %629 = vmatpush1.msra.mxu0 0.0
      %630 = vmatprep.subr.mxu0 0.0
      %631 = vmatpush1.msra.mxu0 0.0
      %632 = vmatprep.subr.mxu0 0.0
      %633 = vmatpush1.msra.mxu0 0.0
      %634 = vmatprep.subr.mxu0 0.0
      %635 = vmatpush1.msra.mxu0 0.0
      %636 = vmatprep.subr.mxu0 0.0
      %637 = vmatpush1.msra.mxu0 0.0
      %638 = vmatprep.subr.mxu0 0.0
      %639 = vmatpush1.msra.mxu0 0.0
      %640 = vmatprep.subr.mxu0 0.0
      %641 = vmatpush1.msra.mxu0 0.0
      %642 = vmatprep.subr.mxu0 0.0
      %643 = vmatpush1.msra.mxu0 0.0
      %644 = vmatprep.subr.mxu0 0.0
      %645 = vmatpush1.msra.mxu0 0.0
      %646 = vmatprep.subr.mxu0 0.0
      %647 = vmatpush1.msra.mxu0 0.0
      %648 = vmatprep.subr.mxu0 0.0
      %649 = vmatpush1.msra.mxu0 0.0
      %650 = vmatprep.subr.mxu0 0.0
      %651 = vmatpush1.msra.mxu0 0.0
      %652 = vmatprep.subr.mxu0 0.0
      %653 = vmatpush1.msra.mxu0 0.0
      %654 = vmatprep.subr.mxu0 0.0
      %655 = vmatpush1.msra.mxu0 0.0
      %656 = vmatprep.subr.mxu0 0.0
      %657 = vmatpush1.msra.mxu0 0.0
      %658 = vmatprep.subr.mxu0 0.0
      %659 = vmatpush1.msra.mxu0 0.0
      %660 = vmatprep.subr.mxu0 0.0
      %661 = vmatpush1.msra.mxu0 0.0
      %662 = vmatprep.subr.mxu0 0.0
      %663 = vmatpush1.msra.mxu0 0.0
      %664 = vmatprep.subr.mxu0 0.0
      %665 = vmatpush1.msra.mxu0 0.0
      %666 = vmatprep.subr.mxu0 0.0
      %667 = vmatpush1.msra.mxu0 0.0
      %668 = vmatprep.subr.mxu0 0.0
      %669 = vmatpush1.msra.mxu0 0.0
      %670 = vmatprep.subr.mxu0 0.0
      %671 = vmatpush1.msra.mxu0 0.0
      %672 = vmatprep.subr.mxu0 0.0
      %673 = vmatpush1.msra.mxu0 0.0
      %674 = vmatprep.mubr.f32.mxu0 0.0
      %675 = vmatmul.mubr.f32.gmra.mrb[0].mxu0 %v608
      %v676 = vpop.f32.mrb[0].mxu0
      %v677 = vadd.f32 0.0, %v676
      %v678 = vpop.f32.mrb[0].mxu0
      %679 = vdwg.mxu0
      %v680 = vadd.f32 %v602, %v677
      %v681 = vld [vmem:[%s6] sm:$0x1]
      %v683 = vlaneseq
      %v684 = vshrl.u32 %v683, 7
      %v685 = vsub.s32 0, %v684
      %v686 = vrot.slane %v681, %v685
      %v688 = vadd.f32 %v680, %v686
      %v689 = vld [vmem:[%s7] sm:$0xff]
      %v690 = vld [vmem:[%s7 + $0x8] sm:$0xff]
      %v691 = vld [vmem:[%s10] sm:$0x1]
      %v693 = vlaneseq
      %v694 = vshrl.u32 %v693, 7
      %v695 = vsub.s32 0, %v694
      %v696 = vrot.slane %v691, %v695
      %vm698 = vcmask 130048
      %v700 = vsel %vm698, %v688, 0
      %702 = vmatprep.subr.mxu0 0.0
      %703 = vmatpush1.msra.mxu0 %v689
      %704 = vmatprep.subr.mxu0 0.0
      %705 = vmatpush1.msra.mxu0 %v690
      %706 = vmatprep.subr.mxu0 0.0
      %707 = vmatpush1.msra.mxu0 0.0
      %708 = vmatprep.subr.mxu0 0.0
      %709 = vmatpush1.msra.mxu0 0.0
      %710 = vmatprep.subr.mxu0 0.0
      %711 = vmatpush1.msra.mxu0 0.0
      %712 = vmatprep.subr.mxu0 0.0
      %713 = vmatpush1.msra.mxu0 0.0
      %714 = vmatprep.subr.mxu0 0.0
      %715 = vmatpush1.msra.mxu0 0.0
      %716 = vmatprep.subr.mxu0 0.0
      %717 = vmatpush1.msra.mxu0 0.0
      %718 = vmatprep.subr.mxu0 0.0
      %719 = vmatpush1.msra.mxu0 0.0
      %720 = vmatprep.subr.mxu0 0.0
      %721 = vmatpush1.msra.mxu0 0.0
      %722 = vmatprep.subr.mxu0 0.0
      %723 = vmatpush1.msra.mxu0 0.0
      %724 = vmatprep.subr.mxu0 0.0
      %725 = vmatpush1.msra.mxu0 0.0
      %726 = vmatprep.subr.mxu0 0.0
      %727 = vmatpush1.msra.mxu0 0.0
      %728 = vmatprep.subr.mxu0 0.0
      %729 = vmatpush1.msra.mxu0 0.0
      %730 = vmatprep.subr.mxu0 0.0
      %731 = vmatpush1.msra.mxu0 0.0
      %732 = vmatprep.subr.mxu0 0.0
      %733 = vmatpush1.msra.mxu0 0.0
      %734 = vmatprep.subr.mxu0 0.0
      %735 = vmatpush1.msra.mxu0 0.0
      %736 = vmatprep.subr.mxu0 0.0
      %737 = vmatpush1.msra.mxu0 0.0
      %738 = vmatprep.subr.mxu0 0.0
      %739 = vmatpush1.msra.mxu0 0.0
      %740 = vmatprep.subr.mxu0 0.0
      %741 = vmatpush1.msra.mxu0 0.0
      %742 = vmatprep.subr.mxu0 0.0
      %743 = vmatpush1.msra.mxu0 0.0
      %744 = vmatprep.subr.mxu0 0.0
      %745 = vmatpush1.msra.mxu0 0.0
      %746 = vmatprep.subr.mxu0 0.0
      %747 = vmatpush1.msra.mxu0 0.0
      %748 = vmatprep.subr.mxu0 0.0
      %749 = vmatpush1.msra.mxu0 0.0
      %750 = vmatprep.subr.mxu0 0.0
      %751 = vmatpush1.msra.mxu0 0.0
      %752 = vmatprep.subr.mxu0 0.0
      %753 = vmatpush1.msra.mxu0 0.0
      %754 = vmatprep.subr.mxu0 0.0
      %755 = vmatpush1.msra.mxu0 0.0
      %756 = vmatprep.subr.mxu0 0.0
      %757 = vmatpush1.msra.mxu0 0.0
      %758 = vmatprep.subr.mxu0 0.0
      %759 = vmatpush1.msra.mxu0 0.0
      %760 = vmatprep.subr.mxu0 0.0
      %761 = vmatpush1.msra.mxu0 0.0
      %762 = vmatprep.subr.mxu0 0.0
      %763 = vmatpush1.msra.mxu0 0.0
      %764 = vmatprep.subr.mxu0 0.0
      %765 = vmatpush1.msra.mxu0 0.0
      %766 = vmatprep.mubr.f32.mxu0 0.0
      %767 = vmatmul.mubr.f32.gmra.mrb[0].mxu0 %v700
      %v768 = vpop.f32.mrb[0].mxu0
      %v769 = vadd.f32 %v696, %v768
      %v770 = vpop.f32.mrb[0].mxu0
      %771 = vdwg.mxu0
      %vm772 = vcmask 39936
      %773 = vst.msk [vmem:[%s450] sm:$0xff] %vm772, %v769
      %v774 = vmul.f32 %v456, %v456
      %v775 = vsel %vm458, %v774, 0.0
      %776 = vadd.xlane.f32.xlu0 %v775
      %v777 = vpop.xlane.xlu0 %776
      %v778 = vadd.f32 %v777, 1e-12
      %v779 = vrsqrt.pop %v778
      %v780 = vmul.f32 %v456, %v779
      %v782 = vsel %vm458, %v780, 0
      %784 = vmatprep.subr.mxu0 0.0
      %785 = vmatpush1.xpose.msra.mxu0 %v782
      %786 = vmatprep.subr.mxu0 0.0
      %787 = vmatpush1.xpose.msra.mxu0 0.0
      %788 = vmatprep.subr.mxu0 0.0
      %789 = vmatpush1.xpose.msra.mxu0 0.0
      %790 = vmatprep.subr.mxu0 0.0
      %791 = vmatpush1.xpose.msra.mxu0 0.0
      %792 = vmatprep.subr.mxu0 0.0
      %793 = vmatpush1.xpose.msra.mxu0 0.0
      %794 = vmatprep.subr.mxu0 0.0
      %795 = vmatpush1.xpose.msra.mxu0 0.0
      %796 = vmatprep.subr.mxu0 0.0
      %797 = vmatpush1.xpose.msra.mxu0 0.0
      %798 = vmatprep.subr.mxu0 0.0
      %799 = vmatpush1.xpose.msra.mxu0 0.0
      %800 = vmatprep.subr.mxu0 0.0
      %801 = vmatpush1.xpose.msra.mxu0 0.0
      %802 = vmatprep.subr.mxu0 0.0
      %803 = vmatpush1.xpose.msra.mxu0 0.0
      %804 = vmatprep.subr.mxu0 0.0
      %805 = vmatpush1.xpose.msra.mxu0 0.0
      %806 = vmatprep.subr.mxu0 0.0
      %807 = vmatpush1.xpose.msra.mxu0 0.0
      %808 = vmatprep.subr.mxu0 0.0
      %809 = vmatpush1.xpose.msra.mxu0 0.0
      %810 = vmatprep.subr.mxu0 0.0
      %811 = vmatpush1.xpose.msra.mxu0 0.0
      %812 = vmatprep.subr.mxu0 0.0
      %813 = vmatpush1.xpose.msra.mxu0 0.0
      %814 = vmatprep.subr.mxu0 0.0
      %815 = vmatpush1.xpose.msra.mxu0 0.0
      %816 = vmatprep.subr.mxu0 0.0
      %817 = vmatpush1.xpose.msra.mxu0 0.0
      %818 = vmatprep.subr.mxu0 0.0
      %819 = vmatpush1.xpose.msra.mxu0 0.0
      %820 = vmatprep.subr.mxu0 0.0
      %821 = vmatpush1.xpose.msra.mxu0 0.0
      %822 = vmatprep.subr.mxu0 0.0
      %823 = vmatpush1.xpose.msra.mxu0 0.0
      %824 = vmatprep.subr.mxu0 0.0
      %825 = vmatpush1.xpose.msra.mxu0 0.0
      %826 = vmatprep.subr.mxu0 0.0
      %827 = vmatpush1.xpose.msra.mxu0 0.0
      %828 = vmatprep.subr.mxu0 0.0
      %829 = vmatpush1.xpose.msra.mxu0 0.0
      %830 = vmatprep.subr.mxu0 0.0
      %831 = vmatpush1.xpose.msra.mxu0 0.0
      %832 = vmatprep.subr.mxu0 0.0
      %833 = vmatpush1.xpose.msra.mxu0 0.0
      %834 = vmatprep.subr.mxu0 0.0
      %835 = vmatpush1.xpose.msra.mxu0 0.0
      %836 = vmatprep.subr.mxu0 0.0
      %837 = vmatpush1.xpose.msra.mxu0 0.0
      %838 = vmatprep.subr.mxu0 0.0
      %839 = vmatpush1.xpose.msra.mxu0 0.0
      %840 = vmatprep.subr.mxu0 0.0
      %841 = vmatpush1.xpose.msra.mxu0 0.0
      %842 = vmatprep.subr.mxu0 0.0
      %843 = vmatpush1.xpose.msra.mxu0 0.0
      %844 = vmatprep.subr.mxu0 0.0
      %845 = vmatpush1.xpose.msra.mxu0 0.0
      %846 = vmatprep.subr.mxu0 0.0
      %847 = vmatpush1.xpose.msra.mxu0 0.0
      %848 = vmatprep.mubr.f32.mxu0 0.0
      %849 = vmatmul.mubr.f32.gmra.mrb[0].mxu0 %v782
      %v850 = vpop.f32.mrb[0].mxu0
      %v851 = vadd.f32 0.0, %v850
      %v852 = vpop.f32.mrb[0].mxu0
      %853 = vdwg.mxu0
      %v854 = vmul.f32 %v851, 1.442695
      %v855 = vpow.pop %v854
      %v856 = vsel %vm458, %v855, 0.0
      %857 = vadd.xlane.f32.xlu0 %v856
      %v858 = vpop.xlane.xlu0 %857
      %v859 = vrcp.pop %v858
      %v860 = vmul.f32 %v855, %v859
      %v862 = vsel %vm458, %v860, 0
      %864 = vmatprep.subr.mxu0 0.0
      %865 = vmatpush1.msra.mxu0 %v688
      %866 = vmatprep.subr.mxu0 0.0
      %867 = vmatpush1.msra.mxu0 0.0
      %868 = vmatprep.subr.mxu0 0.0
      %869 = vmatpush1.msra.mxu0 0.0
      %870 = vmatprep.subr.mxu0 0.0
      %871 = vmatpush1.msra.mxu0 0.0
      %872 = vmatprep.subr.mxu0 0.0
      %873 = vmatpush1.msra.mxu0 0.0
      %874 = vmatprep.subr.mxu0 0.0
      %875 = vmatpush1.msra.mxu0 0.0
      %876 = vmatprep.subr.mxu0 0.0
      %877 = vmatpush1.msra.mxu0 0.0
      %878 = vmatprep.subr.mxu0 0.0
      %879 = vmatpush1.msra.mxu0 0.0
      %880 = vmatprep.subr.mxu0 0.0
      %881 = vmatpush1.msra.mxu0 0.0
      %882 = vmatprep.subr.mxu0 0.0
      %883 = vmatpush1.msra.mxu0 0.0
      %884 = vmatprep.subr.mxu0 0.0
      %885 = vmatpush1.msra.mxu0 0.0
      %886 = vmatprep.subr.mxu0 0.0
      %887 = vmatpush1.msra.mxu0 0.0
      %888 = vmatprep.subr.mxu0 0.0
      %889 = vmatpush1.msra.mxu0 0.0
      %890 = vmatprep.subr.mxu0 0.0
      %891 = vmatpush1.msra.mxu0 0.0
      %892 = vmatprep.subr.mxu0 0.0
      %893 = vmatpush1.msra.mxu0 0.0
      %894 = vmatprep.subr.mxu0 0.0
      %895 = vmatpush1.msra.mxu0 0.0
      %896 = vmatprep.subr.mxu0 0.0
      %897 = vmatpush1.msra.mxu0 0.0
      %898 = vmatprep.subr.mxu0 0.0
      %899 = vmatpush1.msra.mxu0 0.0
      %900 = vmatprep.subr.mxu0 0.0
      %901 = vmatpush1.msra.mxu0 0.0
      %902 = vmatprep.subr.mxu0 0.0
      %903 = vmatpush1.msra.mxu0 0.0
      %904 = vmatprep.subr.mxu0 0.0
      %905 = vmatpush1.msra.mxu0 0.0
      %906 = vmatprep.subr.mxu0 0.0
      %907 = vmatpush1.msra.mxu0 0.0
      %908 = vmatprep.subr.mxu0 0.0
      %909 = vmatpush1.msra.mxu0 0.0
      %910 = vmatprep.subr.mxu0 0.0
      %911 = vmatpush1.msra.mxu0 0.0
      %912 = vmatprep.subr.mxu0 0.0
      %913 = vmatpush1.msra.mxu0 0.0
      %914 = vmatprep.subr.mxu0 0.0
      %915 = vmatpush1.msra.mxu0 0.0
      %916 = vmatprep.subr.mxu0 0.0
      %917 = vmatpush1.msra.mxu0 0.0
      %918 = vmatprep.subr.mxu0 0.0
      %919 = vmatpush1.msra.mxu0 0.0
      %920 = vmatprep.subr.mxu0 0.0
      %921 = vmatpush1.msra.mxu0 0.0
      %922 = vmatprep.subr.mxu0 0.0
      %923 = vmatpush1.msra.mxu0 0.0
      %924 = vmatprep.subr.mxu0 0.0
      %925 = vmatpush1.msra.mxu0 0.0
      %926 = vmatprep.subr.mxu0 0.0
      %927 = vmatpush1.msra.mxu0 0.0
      %928 = vmatprep.mubr.f32.mxu0 0.0
      %929 = vmatmul.mubr.f32.gmra.mrb[0].mxu0 %v862
      %v930 = vpop.f32.mrb[0].mxu0
      %v931 = vadd.f32 0.0, %v930
      %v932 = vpop.f32.mrb[0].mxu0
      %933 = vdwg.mxu0
      %v934 = vmul.f32 %v931, %v931
      %v935 = vsel %vm698, %v934, 0.0
      %936 = vadd.xlane.f32.xlu0 %v935
      %v937 = vpop.xlane.xlu0 %936
      %v938 = vrot.slane %v937, 4
      %v939 = vadd.f32 %v937, %v938
      %v940 = vrot.slane %v939, 2
      %v941 = vadd.f32 %v939, %v940
      %v942 = vrot.slane %v941, 1
      %v943 = vadd.f32 %v941, %v942
      %s944 = vtos %v943
      %v945 = vstv %s944
      %v946 = vld [vmem:[%s8] sm:$0xff]
      %v947 = vld [vmem:[%s8 + $0x8] sm:$0xff]
      %v949 = vsel %vm698, %v931, 0
      %951 = vmatprep.subr.mxu0 0.0
      %952 = vmatpush1.msra.mxu0 %v946
      %953 = vmatprep.subr.mxu0 0.0
      %954 = vmatpush1.msra.mxu0 %v947
      %955 = vmatprep.subr.mxu0 0.0
      %956 = vmatpush1.msra.mxu0 0.0
      %957 = vmatprep.subr.mxu0 0.0
      %958 = vmatpush1.msra.mxu0 0.0
      %959 = vmatprep.subr.mxu0 0.0
      %960 = vmatpush1.msra.mxu0 0.0
      %961 = vmatprep.subr.mxu0 0.0
      %962 = vmatpush1.msra.mxu0 0.0
      %963 = vmatprep.subr.mxu0 0.0
      %964 = vmatpush1.msra.mxu0 0.0
      %965 = vmatprep.subr.mxu0 0.0
      %966 = vmatpush1.msra.mxu0 0.0
      %967 = vmatprep.subr.mxu0 0.0
      %968 = vmatpush1.msra.mxu0 0.0
      %969 = vmatprep.subr.mxu0 0.0
      %970 = vmatpush1.msra.mxu0 0.0
      %971 = vmatprep.subr.mxu0 0.0
      %972 = vmatpush1.msra.mxu0 0.0
      %973 = vmatprep.subr.mxu0 0.0
      %974 = vmatpush1.msra.mxu0 0.0
      %975 = vmatprep.subr.mxu0 0.0
      %976 = vmatpush1.msra.mxu0 0.0
      %977 = vmatprep.subr.mxu0 0.0
      %978 = vmatpush1.msra.mxu0 0.0
      %979 = vmatprep.subr.mxu0 0.0
      %980 = vmatpush1.msra.mxu0 0.0
      %981 = vmatprep.subr.mxu0 0.0
      %982 = vmatpush1.msra.mxu0 0.0
      %983 = vmatprep.subr.mxu0 0.0
      %984 = vmatpush1.msra.mxu0 0.0
      %985 = vmatprep.subr.mxu0 0.0
      %986 = vmatpush1.msra.mxu0 0.0
      %987 = vmatprep.subr.mxu0 0.0
      %988 = vmatpush1.msra.mxu0 0.0
      %989 = vmatprep.subr.mxu0 0.0
      %990 = vmatpush1.msra.mxu0 0.0
      %991 = vmatprep.subr.mxu0 0.0
      %992 = vmatpush1.msra.mxu0 0.0
      %993 = vmatprep.subr.mxu0 0.0
      %994 = vmatpush1.msra.mxu0 0.0
      %995 = vmatprep.subr.mxu0 0.0
      %996 = vmatpush1.msra.mxu0 0.0
      %997 = vmatprep.subr.mxu0 0.0
      %998 = vmatpush1.msra.mxu0 0.0
      %999 = vmatprep.subr.mxu0 0.0
      %1000 = vmatpush1.msra.mxu0 0.0
      %1001 = vmatprep.subr.mxu0 0.0
      %1002 = vmatpush1.msra.mxu0 0.0
      %1003 = vmatprep.subr.mxu0 0.0
      %1004 = vmatpush1.msra.mxu0 0.0
      %1005 = vmatprep.subr.mxu0 0.0
      %1006 = vmatpush1.msra.mxu0 0.0
      %1007 = vmatprep.subr.mxu0 0.0
      %1008 = vmatpush1.msra.mxu0 0.0
      %1009 = vmatprep.subr.mxu0 0.0
      %1010 = vmatpush1.msra.mxu0 0.0
      %1011 = vmatprep.subr.mxu0 0.0
      %1012 = vmatpush1.msra.mxu0 0.0
      %1013 = vmatprep.subr.mxu0 0.0
      %1014 = vmatpush1.msra.mxu0 0.0
      %1015 = vmatprep.mubr.f32.mxu0 0.0
      %1016 = vmatmul.mubr.f32.gmra.mrb[0].mxu0 %v949
      %v1017 = vpop.f32.mrb[0].mxu0
      %v1018 = vadd.f32 0.0, %v1017
      %v1019 = vpop.f32.mrb[0].mxu0
      %1020 = vdwg.mxu0
      %s1021 = scalar_lea.vmem %s450, 8
      %1022 = vst.msk [vmem:[%s1021] sm:$0xff] %vm772, %v1018
      %v1023 = vmul.f32 %v605, %v605
      %v1024 = vsel %vm458, %v1023, 0.0
      %1025 = vadd.xlane.f32.xlu0 %v1024
      %v1026 = vpop.xlane.xlu0 %1025
      %v1027 = vadd.f32 %v1026, 1e-12
      %v1028 = vrsqrt.pop %v1027
      %v1029 = vmul.f32 %v605, %v1028
      %v1031 = vsel %vm458, %v1029, 0
      %1033 = vmatprep.subr.mxu0 0.0
      %1034 = vmatpush1.xpose.msra.mxu0 %v1031
      %1035 = vmatprep.subr.mxu0 0.0
      %1036 = vmatpush1.xpose.msra.mxu0 0.0
      %1037 = vmatprep.subr.mxu0 0.0
      %1038 = vmatpush1.xpose.msra.mxu0 0.0
      %1039 = vmatprep.subr.mxu0 0.0
      %1040 = vmatpush1.xpose.msra.mxu0 0.0
      %1041 = vmatprep.subr.mxu0 0.0
      %1042 = vmatpush1.xpose.msra.mxu0 0.0
      %1043 = vmatprep.subr.mxu0 0.0
      %1044 = vmatpush1.xpose.msra.mxu0 0.0
      %1045 = vmatprep.subr.mxu0 0.0
      %1046 = vmatpush1.xpose.msra.mxu0 0.0
      %1047 = vmatprep.subr.mxu0 0.0
      %1048 = vmatpush1.xpose.msra.mxu0 0.0
      %1049 = vmatprep.subr.mxu0 0.0
      %1050 = vmatpush1.xpose.msra.mxu0 0.0
      %1051 = vmatprep.subr.mxu0 0.0
      %1052 = vmatpush1.xpose.msra.mxu0 0.0
      %1053 = vmatprep.subr.mxu0 0.0
      %1054 = vmatpush1.xpose.msra.mxu0 0.0
      %1055 = vmatprep.subr.mxu0 0.0
      %1056 = vmatpush1.xpose.msra.mxu0 0.0
      %1057 = vmatprep.subr.mxu0 0.0
      %1058 = vmatpush1.xpose.msra.mxu0 0.0
      %1059 = vmatprep.subr.mxu0 0.0
      %1060 = vmatpush1.xpose.msra.mxu0 0.0
      %1061 = vmatprep.subr.mxu0 0.0
      %1062 = vmatpush1.xpose.msra.mxu0 0.0
      %1063 = vmatprep.subr.mxu0 0.0
      %1064 = vmatpush1.xpose.msra.mxu0 0.0
      %1065 = vmatprep.subr.mxu0 0.0
      %1066 = vmatpush1.xpose.msra.mxu0 0.0
      %1067 = vmatprep.subr.mxu0 0.0
      %1068 = vmatpush1.xpose.msra.mxu0 0.0
      %1069 = vmatprep.subr.mxu0 0.0
      %1070 = vmatpush1.xpose.msra.mxu0 0.0
      %1071 = vmatprep.subr.mxu0 0.0
      %1072 = vmatpush1.xpose.msra.mxu0 0.0
      %1073 = vmatprep.subr.mxu0 0.0
      %1074 = vmatpush1.xpose.msra.mxu0 0.0
      %1075 = vmatprep.subr.mxu0 0.0
      %1076 = vmatpush1.xpose.msra.mxu0 0.0
      %1077 = vmatprep.subr.mxu0 0.0
      %1078 = vmatpush1.xpose.msra.mxu0 0.0
      %1079 = vmatprep.subr.mxu0 0.0
      %1080 = vmatpush1.xpose.msra.mxu0 0.0
      %1081 = vmatprep.subr.mxu0 0.0
      %1082 = vmatpush1.xpose.msra.mxu0 0.0
      %1083 = vmatprep.subr.mxu0 0.0
      %1084 = vmatpush1.xpose.msra.mxu0 0.0
      %1085 = vmatprep.subr.mxu0 0.0
      %1086 = vmatpush1.xpose.msra.mxu0 0.0
      %1087 = vmatprep.subr.mxu0 0.0
      %1088 = vmatpush1.xpose.msra.mxu0 0.0
      %1089 = vmatprep.subr.mxu0 0.0
      %1090 = vmatpush1.xpose.msra.mxu0 0.0
      %1091 = vmatprep.subr.mxu0 0.0
      %1092 = vmatpush1.xpose.msra.mxu0 0.0
      %1093 = vmatprep.subr.mxu0 0.0
      %1094 = vmatpush1.xpose.msra.mxu0 0.0
      %1095 = vmatprep.subr.mxu0 0.0
      %1096 = vmatpush1.xpose.msra.mxu0 0.0
      %1097 = vmatprep.mubr.f32.mxu0 0.0
      %1098 = vmatmul.mubr.f32.gmra.mrb[0].mxu0 %v1031
      %v1099 = vpop.f32.mrb[0].mxu0
      %v1100 = vadd.f32 0.0, %v1099
      %v1101 = vpop.f32.mrb[0].mxu0
      %1102 = vdwg.mxu0
      %v1103 = vmul.f32 %v1100, 1.442695
      %v1104 = vpow.pop %v1103
      %v1105 = vsel %vm458, %v1104, 0.0
      %1106 = vadd.xlane.f32.xlu0 %v1105
      %v1107 = vpop.xlane.xlu0 %1106
      %v1108 = vrcp.pop %v1107
      %v1109 = vmul.f32 %v1104, %v1108
      %v1111 = vsel %vm458, %v1109, 0
      %1113 = vmatprep.subr.mxu0 0.0
      %1114 = vmatpush1.msra.mxu0 %v688
      %1115 = vmatprep.subr.mxu0 0.0
      %1116 = vmatpush1.msra.mxu0 0.0
      %1117 = vmatprep.subr.mxu0 0.0
      %1118 = vmatpush1.msra.mxu0 0.0
      %1119 = vmatprep.subr.mxu0 0.0
      %1120 = vmatpush1.msra.mxu0 0.0
      %1121 = vmatprep.subr.mxu0 0.0
      %1122 = vmatpush1.msra.mxu0 0.0
      %1123 = vmatprep.subr.mxu0 0.0
      %1124 = vmatpush1.msra.mxu0 0.0
      %1125 = vmatprep.subr.mxu0 0.0
      %1126 = vmatpush1.msra.mxu0 0.0
      %1127 = vmatprep.subr.mxu0 0.0
      %1128 = vmatpush1.msra.mxu0 0.0
      %1129 = vmatprep.subr.mxu0 0.0
      %1130 = vmatpush1.msra.mxu0 0.0
      %1131 = vmatprep.subr.mxu0 0.0
      %1132 = vmatpush1.msra.mxu0 0.0
      %1133 = vmatprep.subr.mxu0 0.0
      %1134 = vmatpush1.msra.mxu0 0.0
      %1135 = vmatprep.subr.mxu0 0.0
      %1136 = vmatpush1.msra.mxu0 0.0
      %1137 = vmatprep.subr.mxu0 0.0
      %1138 = vmatpush1.msra.mxu0 0.0
      %1139 = vmatprep.subr.mxu0 0.0
      %1140 = vmatpush1.msra.mxu0 0.0
      %1141 = vmatprep.subr.mxu0 0.0
      %1142 = vmatpush1.msra.mxu0 0.0
      %1143 = vmatprep.subr.mxu0 0.0
      %1144 = vmatpush1.msra.mxu0 0.0
      %1145 = vmatprep.subr.mxu0 0.0
      %1146 = vmatpush1.msra.mxu0 0.0
      %1147 = vmatprep.subr.mxu0 0.0
      %1148 = vmatpush1.msra.mxu0 0.0
      %1149 = vmatprep.subr.mxu0 0.0
      %1150 = vmatpush1.msra.mxu0 0.0
      %1151 = vmatprep.subr.mxu0 0.0
      %1152 = vmatpush1.msra.mxu0 0.0
      %1153 = vmatprep.subr.mxu0 0.0
      %1154 = vmatpush1.msra.mxu0 0.0
      %1155 = vmatprep.subr.mxu0 0.0
      %1156 = vmatpush1.msra.mxu0 0.0
      %1157 = vmatprep.subr.mxu0 0.0
      %1158 = vmatpush1.msra.mxu0 0.0
      %1159 = vmatprep.subr.mxu0 0.0
      %1160 = vmatpush1.msra.mxu0 0.0
      %1161 = vmatprep.subr.mxu0 0.0
      %1162 = vmatpush1.msra.mxu0 0.0
      %1163 = vmatprep.subr.mxu0 0.0
      %1164 = vmatpush1.msra.mxu0 0.0
      %1165 = vmatprep.subr.mxu0 0.0
      %1166 = vmatpush1.msra.mxu0 0.0
      %1167 = vmatprep.subr.mxu0 0.0
      %1168 = vmatpush1.msra.mxu0 0.0
      %1169 = vmatprep.subr.mxu0 0.0
      %1170 = vmatpush1.msra.mxu0 0.0
      %1171 = vmatprep.subr.mxu0 0.0
      %1172 = vmatpush1.msra.mxu0 0.0
      %1173 = vmatprep.subr.mxu0 0.0
      %1174 = vmatpush1.msra.mxu0 0.0
      %1175 = vmatprep.subr.mxu0 0.0
      %1176 = vmatpush1.msra.mxu0 0.0
      %1177 = vmatprep.mubr.f32.mxu0 0.0
      %1178 = vmatmul.mubr.f32.gmra.mrb[0].mxu0 %v1111
      %v1179 = vpop.f32.mrb[0].mxu0
      %v1180 = vadd.f32 0.0, %v1179
      %v1181 = vpop.f32.mrb[0].mxu0
      %1182 = vdwg.mxu0
      %v1183 = vmul.f32 %v1180, %v1180
      %v1184 = vsel %vm698, %v1183, 0.0
      %1185 = vadd.xlane.f32.xlu0 %v1184
      %v1186 = vpop.xlane.xlu0 %1185
      %v1187 = vrot.slane %v1186, 4
      %v1188 = vadd.f32 %v1186, %v1187
      %v1189 = vrot.slane %v1188, 2
      %v1190 = vadd.f32 %v1188, %v1189
      %v1191 = vrot.slane %v1190, 1
      %v1192 = vadd.f32 %v1190, %v1191
      %s1193 = vtos %v1192
      %v1194 = vstv %s1193
      %v1195 = vld [vmem:[%s9] sm:$0xff]
      %v1196 = vld [vmem:[%s9 + $0x8] sm:$0xff]
      %v1198 = vsel %vm698, %v1180, 0
      %1200 = vmatprep.subr.mxu0 0.0
      %1201 = vmatpush1.msra.mxu0 %v1195
      %1202 = vmatprep.subr.mxu0 0.0
      %1203 = vmatpush1.msra.mxu0 %v1196
      %1204 = vmatprep.subr.mxu0 0.0
      %1205 = vmatpush1.msra.mxu0 0.0
      %1206 = vmatprep.subr.mxu0 0.0
      %1207 = vmatpush1.msra.mxu0 0.0
      %1208 = vmatprep.subr.mxu0 0.0
      %1209 = vmatpush1.msra.mxu0 0.0
      %1210 = vmatprep.subr.mxu0 0.0
      %1211 = vmatpush1.msra.mxu0 0.0
      %1212 = vmatprep.subr.mxu0 0.0
      %1213 = vmatpush1.msra.mxu0 0.0
      %1214 = vmatprep.subr.mxu0 0.0
      %1215 = vmatpush1.msra.mxu0 0.0
      %1216 = vmatprep.subr.mxu0 0.0
      %1217 = vmatpush1.msra.mxu0 0.0
      %1218 = vmatprep.subr.mxu0 0.0
      %1219 = vmatpush1.msra.mxu0 0.0
      %1220 = vmatprep.subr.mxu0 0.0
      %1221 = vmatpush1.msra.mxu0 0.0
      %1222 = vmatprep.subr.mxu0 0.0
      %1223 = vmatpush1.msra.mxu0 0.0
      %1224 = vmatprep.subr.mxu0 0.0
      %1225 = vmatpush1.msra.mxu0 0.0
      %1226 = vmatprep.subr.mxu0 0.0
      %1227 = vmatpush1.msra.mxu0 0.0
      %1228 = vmatprep.subr.mxu0 0.0
      %1229 = vmatpush1.msra.mxu0 0.0
      %1230 = vmatprep.subr.mxu0 0.0
      %1231 = vmatpush1.msra.mxu0 0.0
      %1232 = vmatprep.subr.mxu0 0.0
      %1233 = vmatpush1.msra.mxu0 0.0
      %1234 = vmatprep.subr.mxu0 0.0
      %1235 = vmatpush1.msra.mxu0 0.0
      %1236 = vmatprep.subr.mxu0 0.0
      %1237 = vmatpush1.msra.mxu0 0.0
      %1238 = vmatprep.subr.mxu0 0.0
      %1239 = vmatpush1.msra.mxu0 0.0
      %1240 = vmatprep.subr.mxu0 0.0
      %1241 = vmatpush1.msra.mxu0 0.0
      %1242 = vmatprep.subr.mxu0 0.0
      %1243 = vmatpush1.msra.mxu0 0.0
      %1244 = vmatprep.subr.mxu0 0.0
      %1245 = vmatpush1.msra.mxu0 0.0
      %1246 = vmatprep.subr.mxu0 0.0
      %1247 = vmatpush1.msra.mxu0 0.0
      %1248 = vmatprep.subr.mxu0 0.0
      %1249 = vmatpush1.msra.mxu0 0.0
      %1250 = vmatprep.subr.mxu0 0.0
      %1251 = vmatpush1.msra.mxu0 0.0
      %1252 = vmatprep.subr.mxu0 0.0
      %1253 = vmatpush1.msra.mxu0 0.0
      %1254 = vmatprep.subr.mxu0 0.0
      %1255 = vmatpush1.msra.mxu0 0.0
      %1256 = vmatprep.subr.mxu0 0.0
      %1257 = vmatpush1.msra.mxu0 0.0
      %1258 = vmatprep.subr.mxu0 0.0
      %1259 = vmatpush1.msra.mxu0 0.0
      %1260 = vmatprep.subr.mxu0 0.0
      %1261 = vmatpush1.msra.mxu0 0.0
      %1262 = vmatprep.subr.mxu0 0.0
      %1263 = vmatpush1.msra.mxu0 0.0
      %1264 = vmatprep.mubr.f32.mxu0 0.0
      %1265 = vmatmul.mubr.f32.gmra.mrb[0].mxu0 %v1198
      %v1266 = vpop.f32.mrb[0].mxu0
      %v1267 = vadd.f32 0.0, %v1266
      %v1268 = vpop.f32.mrb[0].mxu0
      %1269 = vdwg.mxu0
      %s1270 = scalar_lea.vmem %s450, 16
      %1271 = vst.msk [vmem:[%s1270] sm:$0xff] %vm772, %v1267
      %vm1272 = vcmask 7168
      %v1273 = vsel %vm1272, %v945, %v1194
      %vm1274 = vcmask 8192
      %1275 = vst.msk [vmem:[%s453] sm:$0x1] %vm1274, %v1273
      %p1276 = scmp.lt.s32.totalorder %s24, 1
      %s1277 = scalar_select %p1276, %s24, 1
      %s1278 = smul.addr %s1277, 3
      %s1279 = smul.addr %s1278, 8
      %s1280 = scalar_lea.vmem %s11, %s1279
      %p1281 = scmp.lt.s32.totalorder %s24, 1
      %s1282 = scalar_select %p1281, %s24, 1
      %s1283 = scalar_lea.vmem %s12, %s1282
      // Predicated region
      $region65: #{tagger_forward.1} parent=63 // pred_check
        %p1284 = pneg %p288
      $region66: #{tagger_forward.1} parent=63 // pred_check_branch
        %1286 = sbr.rel (%p1284) target = $region68
      $region67: #{tagger_forward.1} parent=63 // pred_region
        _
      $region68: #{tagger_forward.1} parent=63 // pred_fallthru
        _
      // Predicated region
      $region69: #{tagger_forward.1} parent=63 // pred_check
        %p1287 = pneg %p314
      $region70: #{tagger_forward.1} parent=63 // pred_check_branch
        %1289 = sbr.rel (%p1287) target = $region72
      $region71: #{tagger_forward.1} parent=63 // pred_region
        _
      $region72: #{tagger_forward.1} parent=63 // pred_fallthru
        _
    $region64: #{tagger_forward.1} parent=5 // pred_fallthru
      _
    %p1290 = scmp.le.s32.totalorder 2, %s19
    // Predicated region
    $region73: #{tagger_forward.1} parent=5 // pred_check
      %p1291 = pneg %p1290
    $region74: #{tagger_forward.1} parent=5 // pred_check_branch
      %1293 = sbr.rel (%p1291) target = $region76
    $region75: #{tagger_forward.1} parent=5 // pred_region
      %s1294 = ssub.s32 %s19, 2
      // Predicated region
      $region77: #{tagger_forward.1} parent=75 // pred_check
        %p1295 = pneg %p294
      $region78: #{tagger_forward.1} parent=75 // pred_check_branch
        %1297 = sbr.rel (%p1295) target = $region80
      $region79: #{tagger_forward.1} parent=75 // pred_region
        %p1298 = scmp.lt.s32.totalorder %s25, 1
        %s1299 = scalar_select %p1298, %s25, 1
        %s1300 = smul.addr %s1299, 3
        %s1301 = smul.addr %s1300, 8
        %s1302 = scalar_lea.vmem %s11, %s1301
      $region80: #{tagger_forward.1} parent=75 // pred_fallthru
        _
      // Predicated region
      $region81: #{tagger_forward.1} parent=75 // pred_check
        %p1303 = pneg %p320
      $region82: #{tagger_forward.1} parent=75 // pred_check_branch
        %1305 = sbr.rel (%p1303) target = $region84
      $region83: #{tagger_forward.1} parent=75 // pred_region
        %p1306 = scmp.lt.s32.totalorder %s25, 1
        %s1307 = scalar_select %p1306, %s25, 1
        %s1308 = scalar_lea.vmem %s12, %s1307
      $region84: #{tagger_forward.1} parent=75 // pred_fallthru
        _
    $region76: #{tagger_forward.1} parent=5 // pred_fallthru
      _
  $region6: #{tagger_forward.1} parent=0 // loop_footer
    %s23 = sadd.s32 1, %s19
  $region7: #{tagger_forward.1} parent=0 // loop_footer_branch
    %18 = sbr.rel target = $region3
  $region8: #{tagger_forward.1} parent=0 // loop_exit
    _

</llo_original>
